<compile_context>
chip_gen: v7x
topology: tpu7x:2x2x1
jax: 0.10.0
libtpu: 0.0.40
codegen_flags: <defaults>
</compile_context>

<pallas_src>
import functools

import jax
import jax.numpy as jnp
import numpy as np
from jax.experimental import pallas as pl
from jax.experimental.pallas import tpu as pltpu


# ----------------------------------------------------------------------------
# Fused Pallas kernel: all RNN layers + final Linear
# ----------------------------------------------------------------------------
def _fused_rnn_kernel(x_ref, h0_ref, *rest, num_layers, block_t, seq_len,
                      num_blocks):
    """Grid = (cdiv(seq, block_t),), iterated sequentially ("arbitrary").

    x_ref    : (batch, block_t, in_dim)  current slab of x (native layout)
    h0_ref   : (num_layers, batch, H)    initial hidden state
    rest     : [w_ih_t, w_hh_t, b] * num_layers, fc_w_t, fc_b,  y_ref, h_ref
      w_ih_t : (in_l, H)   input->hidden weight, pre-transposed
      w_hh_t : (H, H)      hidden->hidden weight, pre-transposed
      b      : (1, H)      b_ih + b_hh (fused)
      fc_w_t : (H, out)    Linear weight, pre-transposed
      fc_b   : (1, out)    Linear bias
      y_ref  : (batch, out)             output of fc(out[:, -1, :])
      h_ref  : (num_layers, batch, H)   final hidden state; ALSO the resident
                                        carrier of h across grid steps
    """
    w_refs = rest[: 3 * num_layers]
    fc_w_ref, fc_b_ref, y_ref, h_ref = rest[3 * num_layers:]

    t_blk = pl.program_id(0)
    single_block = num_blocks == 1                 # static (Python bool)
    needs_mask = (seq_len % block_t) != 0          # static (Python bool)

    # ---- hoisted loads: once per grid step, reused across the unroll -------
    w_ih = [w_refs[3 * l][...] for l in range(num_layers)]
    w_hh = [w_refs[3 * l + 1][...] for l in range(num_layers)]
    bias = [w_refs[3 * l + 2][...] for l in range(num_layers)]
    x_slab = x_ref[...]                            # (batch, block_t, in)

    # ---- recurrent state kept in locals (vregs) across the whole block -----
    if single_block:
        h = [h0_ref[l] for l in range(num_layers)]
    else:
        @pl.when(t_blk == 0)
        def _():
            h_ref[...] = h0_ref[...].astype(h_ref.dtype)
        h = [h_ref[l] for l in range(num_layers)]

    # ---- layer-0 input projection lifted off the serial recurrence ---------
    # x @ W_ih does not depend on h; compute it for every timestep of the
    # block up front so the recurrence only carries h @ W_hh + add + tanh.
    # TODO(synk): for larger block_t*batch, collapse these into a single
    # (block_t*batch, in) @ (in, H) matmul (lane dim stays intact).
    x_proj = [
        jnp.dot(x_slab[:, i, :], w_ih[0],
                preferred_element_type=jnp.float32) + bias[0]
        for i in range(block_t)
    ]

    # ---- serial recurrence over the block's timesteps (static unroll) ------
    for i in range(block_t):
        valid = (t_blk * block_t + i) < seq_len if needs_mask else None

        # layer 0: only h @ W_hh remains on the critical path
        h_new = jnp.tanh(
            x_proj[i]
            + jnp.dot(h[0], w_hh[0], preferred_element_type=jnp.float32))
        h[0] = jnp.where(valid, h_new, h[0]) if needs_mask else h_new

        for layer in range(1, num_layers):
            h_new = jnp.tanh(
                jnp.dot(h[layer - 1], w_ih[layer],
                        preferred_element_type=jnp.float32)
                + jnp.dot(h[layer], w_hh[layer],
                          preferred_element_type=jnp.float32)
                + bias[layer])
            h[layer] = (jnp.where(valid, h_new, h[layer])
                        if needs_mask else h_new)

    # ---- single writeback of the recurrent state per grid step -------------
    for layer in range(num_layers):
        h_ref[layer] = h[layer].astype(h_ref.dtype)

    # ---- fused Linear on the top layer's state at the last valid timestep --
    @pl.when(t_blk == num_blocks - 1)
    def _():
        y_ref[...] = (jnp.dot(h[num_layers - 1], fc_w_ref[...],
                              preferred_element_type=jnp.float32)
                      + fc_b_ref[...]).astype(y_ref.dtype)


def _choose_time_block(seq, max_block=64):
    """Time-block size: whole sequence if small, else a multiple of 8.

    No divisibility requirement: the grid uses cdiv and the kernel masks the
    tail, so an awkward/prime seq never degenerates to block_t = 1.
    """
    if seq <= max_block:
        return seq            # block dim equals full array dim -> always legal
    return max_block          # multiple of 8 -> sublane-clean partial blocks


# ----------------------------------------------------------------------------
# Wrapper
# ----------------------------------------------------------------------------
def my_rnn_forward(x, hidden, params):
    """Matches MyRNN.forward: returns (fc(out[:, -1, :]), new_hidden)."""
    batch, seq, input_size = x.shape
    num_layers, _, hidden_size = hidden.shape
    out_dim = params["fc_w_t"].shape[1]

    block_t = _choose_time_block(seq)
    num_blocks = pl.cdiv(seq, block_t)

    flat_w = []
    in_specs = [
        # x stays in its native (batch, seq, in) layout: no wrapper transpose.
        pl.BlockSpec((batch, block_t, input_size), lambda t: (0, t, 0)),
        pl.BlockSpec((num_layers, batch, hidden_size), lambda t: (0, 0, 0)),
    ]
    for (w_ih_t, w_hh_t, b) in params["rnn"]:
        flat_w += [w_ih_t, w_hh_t, b]
        in_specs += [
            pl.BlockSpec(w_ih_t.shape, lambda t: (0, 0)),
            pl.BlockSpec(w_hh_t.shape, lambda t: (0, 0)),
            pl.BlockSpec(b.shape, lambda t: (0, 0)),
        ]
    flat_w += [params["fc_w_t"], params["fc_b"]]
    in_specs += [
        pl.BlockSpec(params["fc_w_t"].shape, lambda t: (0, 0)),
        pl.BlockSpec(params["fc_b"].shape, lambda t: (0, 0)),
    ]
    # TODO(synk): at larger H, give the constant-index weight/bias/h0 specs
    # pipeline_mode=pl.Buffered(1) so they are not double-buffered.

    kernel = functools.partial(
        _fused_rnn_kernel,
        num_layers=num_layers,
        block_t=block_t,
        seq_len=seq,
        num_blocks=num_blocks,
    )

    y, h_new = pl.pallas_call(
        kernel,
        out_shape=(
            jax.ShapeDtypeStruct((batch, out_dim), jnp.float32),
            jax.ShapeDtypeStruct((num_layers, batch, hidden_size), jnp.float32),
        ),
        grid_spec=pltpu.PrefetchScalarGridSpec(
            num_scalar_prefetch=0,
            grid=(num_blocks,),
            in_specs=in_specs,
            out_specs=(
                pl.BlockSpec((batch, out_dim), lambda t: (0, 0)),
                pl.BlockSpec((num_layers, batch, hidden_size),
                             lambda t: (0, 0, 0)),
            ),
        ),
        # The recurrence is serial in time -> "arbitrary".
        # TODO(synk): on v7x with batch >= 16, add a leading "parallel"
        # batch-tile grid axis to use both TensorCores.
        compiler_params=pltpu.CompilerParams(
            dimension_semantics=("arbitrary",)),
    )(x, hidden, *flat_w)
    return y, h_new


# ----------------------------------------------------------------------------
# Deterministic parameter init (PyTorch-style uniform(-1/sqrt(H), 1/sqrt(H)))
# ----------------------------------------------------------------------------
def init_params(key, input_size, hidden_size, output_size, num_layers):
    bound = 1.0 / np.sqrt(hidden_size)
    params = {"rnn": []}
    for layer in range(num_layers):
        in_dim = input_size if layer == 0 else hidden_size
        key, k1, k2, k3, k4 = jax.random.split(key, 5)
        w_ih = jax.random.uniform(k1, (hidden_size, in_dim), jnp.float32,
                                  -bound, bound)
        w_hh = jax.random.uniform(k2, (hidden_size, hidden_size), jnp.float32,
                                  -bound, bound)
        b_ih = jax.random.uniform(k3, (hidden_size,), jnp.float32, -bound, bound)
        b_hh = jax.random.uniform(k4, (hidden_size,), jnp.float32, -bound, bound)
        # pre-transposed for (x @ W_ih.T) -> x @ w_ih_t; fuse the two biases
        params["rnn"].append(
            (w_ih.T, w_hh.T, (b_ih + b_hh).reshape(1, hidden_size)))
    key, k5, k6 = jax.random.split(key, 3)
    fc_bound = 1.0 / np.sqrt(hidden_size)
    fc_w = jax.random.uniform(k5, (output_size, hidden_size), jnp.float32,
                              -fc_bound, fc_bound)
    fc_b = jax.random.uniform(k6, (output_size,), jnp.float32,
                              -fc_bound, fc_bound)
    params["fc_w_t"] = fc_w.T
    params["fc_b"] = fc_b.reshape(1, output_size)
    return params


# ----------------------------------------------------------------------------
# Pure-JAX reference (mirrors torch.nn.RNN + Linear) for verification
# ----------------------------------------------------------------------------
def reference_forward(x, hidden, params):
    x_tm = jnp.transpose(x, (1, 0, 2))
    h_finals = []
    inp = x_tm
    for layer_idx, (w_ih_t, w_hh_t, b) in enumerate(params["rnn"]):
        def step(h, x_t):
            h_new = jnp.tanh(x_t @ w_ih_t + h @ w_hh_t + b)
            return h_new, h_new
        h_last, outs = jax.lax.scan(step, hidden[layer_idx], inp)
        h_finals.append(h_last)
        inp = outs
    out = inp[-1] @ params["fc_w_t"] + params["fc_b"]
    return out, jnp.stack(h_finals, axis=0)


# ----------------------------------------------------------------------------
if __name__ == "__main__":
    batch, seq = 2, 8
    input_size, hidden_size, output_size, num_layers = 4, 32, 3, 2

    key = jax.random.PRNGKey(0)
    key, kx, kh = jax.random.split(key, 3)
    x = jax.random.normal(kx, (batch, seq, input_size), jnp.float32)
    hidden = jax.random.normal(kh, (num_layers, batch, hidden_size), jnp.float32)
    params = init_params(key, input_size, hidden_size, output_size, num_layers)

    fwd = jax.jit(my_rnn_forward)
    out, new_hidden = fwd(x, hidden, params)
    out = jax.block_until_ready(out)
    new_hidden = jax.block_until_ready(new_hidden)

    ref_out, ref_hidden = reference_forward(x, hidden, params)
    assert out.shape == (batch, output_size)
    assert new_hidden.shape == (num_layers, batch, hidden_size)
    np.testing.assert_allclose(np.asarray(out), np.asarray(ref_out),
                               rtol=1e-5, atol=1e-5)
    np.testing.assert_allclose(np.asarray(new_hidden), np.asarray(ref_hidden),
                               rtol=1e-5, atol=1e-5)
    print("KERNEL_OK")
</pallas_src>

<mosaic_0001>
module attributes {stable_mosaic.version = 11 : i64} {
  func.func @_fused_rnn_kernel(%arg0: i32, %arg1: memref<2x8x4xf32, #tpu.memory_space<vmem>>, %arg2: memref<2x2x32xf32, #tpu.memory_space<vmem>>, %arg3: memref<4x32xf32, #tpu.memory_space<vmem>>, %arg4: memref<32x32xf32, #tpu.memory_space<vmem>>, %arg5: memref<1x32xf32, #tpu.memory_space<vmem>>, %arg6: memref<32x32xf32, #tpu.memory_space<vmem>>, %arg7: memref<32x32xf32, #tpu.memory_space<vmem>>, %arg8: memref<1x32xf32, #tpu.memory_space<vmem>>, %arg9: memref<32x3xf32, #tpu.memory_space<vmem>>, %arg10: memref<1x3xf32, #tpu.memory_space<vmem>>, %arg11: memref<2x3xf32, #tpu.memory_space<vmem>>, %arg12: memref<2x2x32xf32, #tpu.memory_space<vmem>>) attributes {dimension_semantics = [#tpu.dimension_semantics<arbitrary>], iteration_bounds = array<i64: 1>, scalar_prefetch = 0 : i64, scratch_operands = 0 : i64, tpu.core_type = #tpu.core_type<tc>, window_params = [{transform_indices = @transform_0, window_bounds = array<i64: 2, 8, 4>}, {pipeline_mode = #tpu.pipeline_mode<synchronous>, transform_indices = @transform_1, window_bounds = array<i64: 2, 2, 32>}, {pipeline_mode = #tpu.pipeline_mode<synchronous>, transform_indices = @transform_2, window_bounds = array<i64: 4, 32>}, {pipeline_mode = #tpu.pipeline_mode<synchronous>, transform_indices = @transform_3, window_bounds = array<i64: 32, 32>}, {pipeline_mode = #tpu.pipeline_mode<synchronous>, transform_indices = @transform_4, window_bounds = array<i64: 1, 32>}, {pipeline_mode = #tpu.pipeline_mode<synchronous>, transform_indices = @transform_5, window_bounds = array<i64: 32, 32>}, {pipeline_mode = #tpu.pipeline_mode<synchronous>, transform_indices = @transform_6, window_bounds = array<i64: 32, 32>}, {pipeline_mode = #tpu.pipeline_mode<synchronous>, transform_indices = @transform_7, window_bounds = array<i64: 1, 32>}, {pipeline_mode = #tpu.pipeline_mode<synchronous>, transform_indices = @transform_8, window_bounds = array<i64: 32, 3>}, {pipeline_mode = #tpu.pipeline_mode<synchronous>, transform_indices = @transform_9, window_bounds = array<i64: 1, 3>}, {pipeline_mode = #tpu.pipeline_mode<synchronous>, transform_indices = @transform_10, window_bounds = array<i64: 2, 3>}, {pipeline_mode = #tpu.pipeline_mode<synchronous>, transform_indices = @transform_11, window_bounds = array<i64: 2, 2, 32>}]} {
    %c0 = arith.constant 0 : index
    %c0_0 = arith.constant 0 : index
    %0 = vector.load %arg3[%c0, %c0_0] : memref<4x32xf32, #tpu.memory_space<vmem>>, vector<4x32xf32>
    %c0_1 = arith.constant 0 : index
    %c0_2 = arith.constant 0 : index
    %1 = vector.load %arg6[%c0_1, %c0_2] : memref<32x32xf32, #tpu.memory_space<vmem>>, vector<32x32xf32>
    %c0_3 = arith.constant 0 : index
    %c0_4 = arith.constant 0 : index
    %2 = vector.load %arg4[%c0_3, %c0_4] : memref<32x32xf32, #tpu.memory_space<vmem>>, vector<32x32xf32>
    %c0_5 = arith.constant 0 : index
    %c0_6 = arith.constant 0 : index
    %3 = vector.load %arg7[%c0_5, %c0_6] : memref<32x32xf32, #tpu.memory_space<vmem>>, vector<32x32xf32>
    %c0_7 = arith.constant 0 : index
    %c0_8 = arith.constant 0 : index
    %4 = vector.load %arg5[%c0_7, %c0_8] : memref<1x32xf32, #tpu.memory_space<vmem>>, vector<1x32xf32>
    %c0_9 = arith.constant 0 : index
    %c0_10 = arith.constant 0 : index
    %5 = vector.load %arg8[%c0_9, %c0_10] : memref<1x32xf32, #tpu.memory_space<vmem>>, vector<1x32xf32>
    %c0_11 = arith.constant 0 : index
    %c0_12 = arith.constant 0 : index
    %c0_13 = arith.constant 0 : index
    %6 = vector.load %arg1[%c0_11, %c0_12, %c0_13] : memref<2x8x4xf32, #tpu.memory_space<vmem>>, vector<2x8x4xf32>
    %c0_14 = arith.constant 0 : index
    %c0_15 = arith.constant 0 : index
    %c0_16 = arith.constant 0 : index
    %7 = vector.load %arg2[%c0_14, %c0_15, %c0_16] : memref<2x2x32xf32, #tpu.memory_space<vmem>>, vector<1x2x32xf32>
    %8 = vector.shape_cast %7 : vector<1x2x32xf32> to vector<2x32xf32>
    %c1 = arith.constant 1 : index
    %c0_17 = arith.constant 0 : index
    %c0_18 = arith.constant 0 : index
    %9 = vector.load %arg2[%c1, %c0_17, %c0_18] : memref<2x2x32xf32, #tpu.memory_space<vmem>>, vector<1x2x32xf32>
    %10 = vector.shape_cast %9 : vector<1x2x32xf32> to vector<2x32xf32>
    %11 = vector.extract_strided_slice %6 {offsets = [0, 0, 0], sizes = [2, 1, 4], strides = [1, 1, 1]} : vector<2x8x4xf32> to vector<2x1x4xf32>
    %12 = vector.shape_cast %11 : vector<2x1x4xf32> to vector<2x4xf32>
    %cst = arith.constant dense<0.000000e+00> : vector<2x32xf32>
    %13 = tpu.matmul %12, %0, %cst {dimension_numbers = #tpu.dot_dimension_numbers<[1], [0], [0], [1], [0, 0, 1, 1], [], []>} : vector<2x4xf32>, vector<4x32xf32>, vector<2x32xf32> -> vector<2x32xf32>
    %14 = vector.broadcast %4 : vector<1x32xf32> to vector<2x32xf32>
    %15 = arith.addf %13, %14 : vector<2x32xf32>
    %16 = vector.extract_strided_slice %6 {offsets = [0, 1, 0], sizes = [2, 1, 4], strides = [1, 1, 1]} : vector<2x8x4xf32> to vector<2x1x4xf32>
    %17 = vector.shape_cast %16 : vector<2x1x4xf32> to vector<2x4xf32>
    %cst_19 = arith.constant dense<0.000000e+00> : vector<2x32xf32>
    %18 = tpu.matmul %17, %0, %cst_19 {dimension_numbers = #tpu.dot_dimension_numbers<[1], [0], [0], [1], [0, 0, 1, 1], [], []>} : vector<2x4xf32>, vector<4x32xf32>, vector<2x32xf32> -> vector<2x32xf32>
    %19 = vector.broadcast %4 : vector<1x32xf32> to vector<2x32xf32>
    %20 = arith.addf %18, %19 : vector<2x32xf32>
    %21 = vector.extract_strided_slice %6 {offsets = [0, 2, 0], sizes = [2, 1, 4], strides = [1, 1, 1]} : vector<2x8x4xf32> to vector<2x1x4xf32>
    %22 = vector.shape_cast %21 : vector<2x1x4xf32> to vector<2x4xf32>
    %cst_20 = arith.constant dense<0.000000e+00> : vector<2x32xf32>
    %23 = tpu.matmul %22, %0, %cst_20 {dimension_numbers = #tpu.dot_dimension_numbers<[1], [0], [0], [1], [0, 0, 1, 1], [], []>} : vector<2x4xf32>, vector<4x32xf32>, vector<2x32xf32> -> vector<2x32xf32>
    %24 = vector.broadcast %4 : vector<1x32xf32> to vector<2x32xf32>
    %25 = arith.addf %23, %24 : vector<2x32xf32>
    %26 = vector.extract_strided_slice %6 {offsets = [0, 3, 0], sizes = [2, 1, 4], strides = [1, 1, 1]} : vector<2x8x4xf32> to vector<2x1x4xf32>
    %27 = vector.shape_cast %26 : vector<2x1x4xf32> to vector<2x4xf32>
    %cst_21 = arith.constant dense<0.000000e+00> : vector<2x32xf32>
    %28 = tpu.matmul %27, %0, %cst_21 {dimension_numbers = #tpu.dot_dimension_numbers<[1], [0], [0], [1], [0, 0, 1, 1], [], []>} : vector<2x4xf32>, vector<4x32xf32>, vector<2x32xf32> -> vector<2x32xf32>
    %29 = vector.broadcast %4 : vector<1x32xf32> to vector<2x32xf32>
    %30 = arith.addf %28, %29 : vector<2x32xf32>
    %31 = vector.extract_strided_slice %6 {offsets = [0, 4, 0], sizes = [2, 1, 4], strides = [1, 1, 1]} : vector<2x8x4xf32> to vector<2x1x4xf32>
    %32 = vector.shape_cast %31 : vector<2x1x4xf32> to vector<2x4xf32>
    %cst_22 = arith.constant dense<0.000000e+00> : vector<2x32xf32>
    %33 = tpu.matmul %32, %0, %cst_22 {dimension_numbers = #tpu.dot_dimension_numbers<[1], [0], [0], [1], [0, 0, 1, 1], [], []>} : vector<2x4xf32>, vector<4x32xf32>, vector<2x32xf32> -> vector<2x32xf32>
    %34 = vector.broadcast %4 : vector<1x32xf32> to vector<2x32xf32>
    %35 = arith.addf %33, %34 : vector<2x32xf32>
    %36 = vector.extract_strided_slice %6 {offsets = [0, 5, 0], sizes = [2, 1, 4], strides = [1, 1, 1]} : vector<2x8x4xf32> to vector<2x1x4xf32>
    %37 = vector.shape_cast %36 : vector<2x1x4xf32> to vector<2x4xf32>
    %cst_23 = arith.constant dense<0.000000e+00> : vector<2x32xf32>
    %38 = tpu.matmul %37, %0, %cst_23 {dimension_numbers = #tpu.dot_dimension_numbers<[1], [0], [0], [1], [0, 0, 1, 1], [], []>} : vector<2x4xf32>, vector<4x32xf32>, vector<2x32xf32> -> vector<2x32xf32>
    %39 = vector.broadcast %4 : vector<1x32xf32> to vector<2x32xf32>
    %40 = arith.addf %38, %39 : vector<2x32xf32>
    %41 = vector.extract_strided_slice %6 {offsets = [0, 6, 0], sizes = [2, 1, 4], strides = [1, 1, 1]} : vector<2x8x4xf32> to vector<2x1x4xf32>
    %42 = vector.shape_cast %41 : vector<2x1x4xf32> to vector<2x4xf32>
    %cst_24 = arith.constant dense<0.000000e+00> : vector<2x32xf32>
    %43 = tpu.matmul %42, %0, %cst_24 {dimension_numbers = #tpu.dot_dimension_numbers<[1], [0], [0], [1], [0, 0, 1, 1], [], []>} : vector<2x4xf32>, vector<4x32xf32>, vector<2x32xf32> -> vector<2x32xf32>
    %44 = vector.broadcast %4 : vector<1x32xf32> to vector<2x32xf32>
    %45 = arith.addf %43, %44 : vector<2x32xf32>
    %46 = vector.extract_strided_slice %6 {offsets = [0, 7, 0], sizes = [2, 1, 4], strides = [1, 1, 1]} : vector<2x8x4xf32> to vector<2x1x4xf32>
    %47 = vector.shape_cast %46 : vector<2x1x4xf32> to vector<2x4xf32>
    %cst_25 = arith.constant dense<0.000000e+00> : vector<2x32xf32>
    %48 = tpu.matmul %47, %0, %cst_25 {dimension_numbers = #tpu.dot_dimension_numbers<[1], [0], [0], [1], [0, 0, 1, 1], [], []>} : vector<2x4xf32>, vector<4x32xf32>, vector<2x32xf32> -> vector<2x32xf32>
    %49 = vector.broadcast %4 : vector<1x32xf32> to vector<2x32xf32>
    %50 = arith.addf %48, %49 : vector<2x32xf32>
    %cst_26 = arith.constant dense<0.000000e+00> : vector<2x32xf32>
    %51 = tpu.matmul %8, %2, %cst_26 {dimension_numbers = #tpu.dot_dimension_numbers<[1], [0], [0], [1], [0, 0, 1, 1], [], []>} : vector<2x32xf32>, vector<32x32xf32>, vector<2x32xf32> -> vector<2x32xf32>
    %52 = arith.addf %15, %51 : vector<2x32xf32>
    %53 = math.tanh %52 : vector<2x32xf32>
    %cst_27 = arith.constant dense<0.000000e+00> : vector<2x32xf32>
    %54 = tpu.matmul %53, %1, %cst_27 {dimension_numbers = #tpu.dot_dimension_numbers<[1], [0], [0], [1], [0, 0, 1, 1], [], []>} : vector<2x32xf32>, vector<32x32xf32>, vector<2x32xf32> -> vector<2x32xf32>
    %cst_28 = arith.constant dense<0.000000e+00> : vector<2x32xf32>
    %55 = tpu.matmul %10, %3, %cst_28 {dimension_numbers = #tpu.dot_dimension_numbers<[1], [0], [0], [1], [0, 0, 1, 1], [], []>} : vector<2x32xf32>, vector<32x32xf32>, vector<2x32xf32> -> vector<2x32xf32>
    %56 = arith.addf %54, %55 : vector<2x32xf32>
    %57 = vector.broadcast %5 : vector<1x32xf32> to vector<2x32xf32>
    %58 = arith.addf %56, %57 : vector<2x32xf32>
    %59 = math.tanh %58 : vector<2x32xf32>
    %cst_29 = arith.constant dense<0.000000e+00> : vector<2x32xf32>
    %60 = tpu.matmul %53, %2, %cst_29 {dimension_numbers = #tpu.dot_dimension_numbers<[1], [0], [0], [1], [0, 0, 1, 1], [], []>} : vector<2x32xf32>, vector<32x32xf32>, vector<2x32xf32> -> vector<2x32xf32>
    %61 = arith.addf %20, %60 : vector<2x32xf32>
    %62 = math.tanh %61 : vector<2x32xf32>
    %cst_30 = arith.constant dense<0.000000e+00> : vector<2x32xf32>
    %63 = tpu.matmul %62, %1, %cst_30 {dimension_numbers = #tpu.dot_dimension_numbers<[1], [0], [0], [1], [0, 0, 1, 1], [], []>} : vector<2x32xf32>, vector<32x32xf32>, vector<2x32xf32> -> vector<2x32xf32>
    %cst_31 = arith.constant dense<0.000000e+00> : vector<2x32xf32>
    %64 = tpu.matmul %59, %3, %cst_31 {dimension_numbers = #tpu.dot_dimension_numbers<[1], [0], [0], [1], [0, 0, 1, 1], [], []>} : vector<2x32xf32>, vector<32x32xf32>, vector<2x32xf32> -> vector<2x32xf32>
    %65 = arith.addf %63, %64 : vector<2x32xf32>
    %66 = vector.broadcast %5 : vector<1x32xf32> to vector<2x32xf32>
    %67 = arith.addf %65, %66 : vector<2x32xf32>
    %68 = math.tanh %67 : vector<2x32xf32>
    %cst_32 = arith.constant dense<0.000000e+00> : vector<2x32xf32>
    %69 = tpu.matmul %62, %2, %cst_32 {dimension_numbers = #tpu.dot_dimension_numbers<[1], [0], [0], [1], [0, 0, 1, 1], [], []>} : vector<2x32xf32>, vector<32x32xf32>, vector<2x32xf32> -> vector<2x32xf32>
    %70 = arith.addf %25, %69 : vector<2x32xf32>
    %71 = math.tanh %70 : vector<2x32xf32>
    %cst_33 = arith.constant dense<0.000000e+00> : vector<2x32xf32>
    %72 = tpu.matmul %71, %1, %cst_33 {dimension_numbers = #tpu.dot_dimension_numbers<[1], [0], [0], [1], [0, 0, 1, 1], [], []>} : vector<2x32xf32>, vector<32x32xf32>, vector<2x32xf32> -> vector<2x32xf32>
    %cst_34 = arith.constant dense<0.000000e+00> : vector<2x32xf32>
    %73 = tpu.matmul %68, %3, %cst_34 {dimension_numbers = #tpu.dot_dimension_numbers<[1], [0], [0], [1], [0, 0, 1, 1], [], []>} : vector<2x32xf32>, vector<32x32xf32>, vector<2x32xf32> -> vector<2x32xf32>
    %74 = arith.addf %72, %73 : vector<2x32xf32>
    %75 = vector.broadcast %5 : vector<1x32xf32> to vector<2x32xf32>
    %76 = arith.addf %74, %75 : vector<2x32xf32>
    %77 = math.tanh %76 : vector<2x32xf32>
    %cst_35 = arith.constant dense<0.000000e+00> : vector<2x32xf32>
    %78 = tpu.matmul %71, %2, %cst_35 {dimension_numbers = #tpu.dot_dimension_numbers<[1], [0], [0], [1], [0, 0, 1, 1], [], []>} : vector<2x32xf32>, vector<32x32xf32>, vector<2x32xf32> -> vector<2x32xf32>
    %79 = arith.addf %30, %78 : vector<2x32xf32>
    %80 = math.tanh %79 : vector<2x32xf32>
    %cst_36 = arith.constant dense<0.000000e+00> : vector<2x32xf32>
    %81 = tpu.matmul %80, %1, %cst_36 {dimension_numbers = #tpu.dot_dimension_numbers<[1], [0], [0], [1], [0, 0, 1, 1], [], []>} : vector<2x32xf32>, vector<32x32xf32>, vector<2x32xf32> -> vector<2x32xf32>
    %cst_37 = arith.constant dense<0.000000e+00> : vector<2x32xf32>
    %82 = tpu.matmul %77, %3, %cst_37 {dimension_numbers = #tpu.dot_dimension_numbers<[1], [0], [0], [1], [0, 0, 1, 1], [], []>} : vector<2x32xf32>, vector<32x32xf32>, vector<2x32xf32> -> vector<2x32xf32>
    %83 = arith.addf %81, %82 : vector<2x32xf32>
    %84 = vector.broadcast %5 : vector<1x32xf32> to vector<2x32xf32>
    %85 = arith.addf %83, %84 : vector<2x32xf32>
    %86 = math.tanh %85 : vector<2x32xf32>
    %cst_38 = arith.constant dense<0.000000e+00> : vector<2x32xf32>
    %87 = tpu.matmul %80, %2, %cst_38 {dimension_numbers = #tpu.dot_dimension_numbers<[1], [0], [0], [1], [0, 0, 1, 1], [], []>} : vector<2x32xf32>, vector<32x32xf32>, vector<2x32xf32> -> vector<2x32xf32>
    %88 = arith.addf %35, %87 : vector<2x32xf32>
    %89 = math.tanh %88 : vector<2x32xf32>
    %cst_39 = arith.constant dense<0.000000e+00> : vector<2x32xf32>
    %90 = tpu.matmul %89, %1, %cst_39 {dimension_numbers = #tpu.dot_dimension_numbers<[1], [0], [0], [1], [0, 0, 1, 1], [], []>} : vector<2x32xf32>, vector<32x32xf32>, vector<2x32xf32> -> vector<2x32xf32>
    %cst_40 = arith.constant dense<0.000000e+00> : vector<2x32xf32>
    %91 = tpu.matmul %86, %3, %cst_40 {dimension_numbers = #tpu.dot_dimension_numbers<[1], [0], [0], [1], [0, 0, 1, 1], [], []>} : vector<2x32xf32>, vector<32x32xf32>, vector<2x32xf32> -> vector<2x32xf32>
    %92 = arith.addf %90, %91 : vector<2x32xf32>
    %93 = vector.broadcast %5 : vector<1x32xf32> to vector<2x32xf32>
    %94 = arith.addf %92, %93 : vector<2x32xf32>
    %95 = math.tanh %94 : vector<2x32xf32>
    %cst_41 = arith.constant dense<0.000000e+00> : vector<2x32xf32>
    %96 = tpu.matmul %89, %2, %cst_41 {dimension_numbers = #tpu.dot_dimension_numbers<[1], [0], [0], [1], [0, 0, 1, 1], [], []>} : vector<2x32xf32>, vector<32x32xf32>, vector<2x32xf32> -> vector<2x32xf32>
    %97 = arith.addf %40, %96 : vector<2x32xf32>
    %98 = math.tanh %97 : vector<2x32xf32>
    %cst_42 = arith.constant dense<0.000000e+00> : vector<2x32xf32>
    %99 = tpu.matmul %98, %1, %cst_42 {dimension_numbers = #tpu.dot_dimension_numbers<[1], [0], [0], [1], [0, 0, 1, 1], [], []>} : vector<2x32xf32>, vector<32x32xf32>, vector<2x32xf32> -> vector<2x32xf32>
    %cst_43 = arith.constant dense<0.000000e+00> : vector<2x32xf32>
    %100 = tpu.matmul %95, %3, %cst_43 {dimension_numbers = #tpu.dot_dimension_numbers<[1], [0], [0], [1], [0, 0, 1, 1], [], []>} : vector<2x32xf32>, vector<32x32xf32>, vector<2x32xf32> -> vector<2x32xf32>
    %101 = arith.addf %99, %100 : vector<2x32xf32>
    %102 = vector.broadcast %5 : vector<1x32xf32> to vector<2x32xf32>
    %103 = arith.addf %101, %102 : vector<2x32xf32>
    %104 = math.tanh %103 : vector<2x32xf32>
    %cst_44 = arith.constant dense<0.000000e+00> : vector<2x32xf32>
    %105 = tpu.matmul %98, %2, %cst_44 {dimension_numbers = #tpu.dot_dimension_numbers<[1], [0], [0], [1], [0, 0, 1, 1], [], []>} : vector<2x32xf32>, vector<32x32xf32>, vector<2x32xf32> -> vector<2x32xf32>
    %106 = arith.addf %45, %105 : vector<2x32xf32>
    %107 = math.tanh %106 : vector<2x32xf32>
    %cst_45 = arith.constant dense<0.000000e+00> : vector<2x32xf32>
    %108 = tpu.matmul %107, %1, %cst_45 {dimension_numbers = #tpu.dot_dimension_numbers<[1], [0], [0], [1], [0, 0, 1, 1], [], []>} : vector<2x32xf32>, vector<32x32xf32>, vector<2x32xf32> -> vector<2x32xf32>
    %cst_46 = arith.constant dense<0.000000e+00> : vector<2x32xf32>
    %109 = tpu.matmul %104, %3, %cst_46 {dimension_numbers = #tpu.dot_dimension_numbers<[1], [0], [0], [1], [0, 0, 1, 1], [], []>} : vector<2x32xf32>, vector<32x32xf32>, vector<2x32xf32> -> vector<2x32xf32>
    %110 = arith.addf %108, %109 : vector<2x32xf32>
    %111 = vector.broadcast %5 : vector<1x32xf32> to vector<2x32xf32>
    %112 = arith.addf %110, %111 : vector<2x32xf32>
    %113 = math.tanh %112 : vector<2x32xf32>
    %cst_47 = arith.constant dense<0.000000e+00> : vector<2x32xf32>
    %114 = tpu.matmul %107, %2, %cst_47 {dimension_numbers = #tpu.dot_dimension_numbers<[1], [0], [0], [1], [0, 0, 1, 1], [], []>} : vector<2x32xf32>, vector<32x32xf32>, vector<2x32xf32> -> vector<2x32xf32>
    %115 = arith.addf %50, %114 : vector<2x32xf32>
    %116 = math.tanh %115 : vector<2x32xf32>
    %cst_48 = arith.constant dense<0.000000e+00> : vector<2x32xf32>
    %117 = tpu.matmul %116, %1, %cst_48 {dimension_numbers = #tpu.dot_dimension_numbers<[1], [0], [0], [1], [0, 0, 1, 1], [], []>} : vector<2x32xf32>, vector<32x32xf32>, vector<2x32xf32> -> vector<2x32xf32>
    %cst_49 = arith.constant dense<0.000000e+00> : vector<2x32xf32>
    %118 = tpu.matmul %113, %3, %cst_49 {dimension_numbers = #tpu.dot_dimension_numbers<[1], [0], [0], [1], [0, 0, 1, 1], [], []>} : vector<2x32xf32>, vector<32x32xf32>, vector<2x32xf32> -> vector<2x32xf32>
    %119 = arith.addf %117, %118 : vector<2x32xf32>
    %120 = vector.broadcast %5 : vector<1x32xf32> to vector<2x32xf32>
    %121 = arith.addf %119, %120 : vector<2x32xf32>
    %122 = math.tanh %121 : vector<2x32xf32>
    %c0_50 = arith.constant 0 : index
    %c0_51 = arith.constant 0 : index
    %c0_52 = arith.constant 0 : index
    %123 = vector.load %arg12[%c0_50, %c0_51, %c0_52] : memref<2x2x32xf32, #tpu.memory_space<vmem>>, vector<1x2x32xf32>
    %124 = vector.shape_cast %123 : vector<1x2x32xf32> to vector<2x32xf32>
    %125 = vector.shape_cast %116 : vector<2x32xf32> to vector<1x2x32xf32>
    tpu.vector_store %arg12[%c0_50, %c0_51, %c0_52], %125 {strides = array<i32>} : memref<2x2x32xf32, #tpu.memory_space<vmem>>, vector<1x2x32xf32>,
    %c1_53 = arith.constant 1 : index
    %c0_54 = arith.constant 0 : index
    %c0_55 = arith.constant 0 : index
    %126 = vector.load %arg12[%c1_53, %c0_54, %c0_55] : memref<2x2x32xf32, #tpu.memory_space<vmem>>, vector<1x2x32xf32>
    %127 = vector.shape_cast %126 : vector<1x2x32xf32> to vector<2x32xf32>
    %128 = vector.shape_cast %122 : vector<2x32xf32> to vector<1x2x32xf32>
    tpu.vector_store %arg12[%c1_53, %c0_54, %c0_55], %128 {strides = array<i32>} : memref<2x2x32xf32, #tpu.memory_space<vmem>>, vector<1x2x32xf32>,
    %c0_i32 = arith.constant 0 : i32
    %129 = arith.cmpi eq, %arg0, %c0_i32 : i32
    %130 = arith.extui %129 : i1 to i32
    %c0_i32_56 = arith.constant 0 : i32
    %131 = arith.cmpi ne, %130, %c0_i32_56 : i32
    scf.if %131 {
      %c0_57 = arith.constant 0 : index
      %c0_58 = arith.constant 0 : index
      %132 = vector.load %arg9[%c0_57, %c0_58] : memref<32x3xf32, #tpu.memory_space<vmem>>, vector<32x3xf32>
      %cst_59 = arith.constant dense<0.000000e+00> : vector<2x3xf32>
      %133 = tpu.matmul %122, %132, %cst_59 {dimension_numbers = #tpu.dot_dimension_numbers<[1], [0], [0], [1], [0, 0, 1, 1], [], []>} : vector<2x32xf32>, vector<32x3xf32>, vector<2x3xf32> -> vector<2x3xf32>
      %c0_60 = arith.constant 0 : index
      %c0_61 = arith.constant 0 : index
      %134 = vector.load %arg10[%c0_60, %c0_61] : memref<1x3xf32, #tpu.memory_space<vmem>>, vector<1x3xf32>
      %135 = vector.broadcast %134 : vector<1x3xf32> to vector<2x3xf32>
      %136 = arith.addf %133, %135 : vector<2x3xf32>
      %c0_62 = arith.constant 0 : index
      %c0_63 = arith.constant 0 : index
      %137 = vector.load %arg11[%c0_62, %c0_63] : memref<2x3xf32, #tpu.memory_space<vmem>>, vector<2x3xf32>
      tpu.vector_store %arg11[%c0_62, %c0_63], %136 {strides = array<i32>} : memref<2x3xf32, #tpu.memory_space<vmem>>, vector<2x3xf32>,
    } else {
    }
    return
  }
  func.func @transform_0(%arg0: i32) -> (i32, i32, i32) {
    %c0_i32 = arith.constant 0 : i32
    %c0_i32_0 = arith.constant 0 : i32
    %c0_i32_1 = arith.constant 0 : i32
    return %c0_i32, %arg0, %c0_i32_0 : i32, i32, i32
  }
  func.func @transform_1(%arg0: i32) -> (i32, i32, i32) {
    %c0_i32 = arith.constant 0 : i32
    %c0_i32_0 = arith.constant 0 : i32
    %c0_i32_1 = arith.constant 0 : i32
    %c0_i32_2 = arith.constant 0 : i32
    return %c0_i32, %c0_i32_0, %c0_i32_1 : i32, i32, i32
  }
  func.func @transform_2(%arg0: i32) -> (i32, i32) {
    %c0_i32 = arith.constant 0 : i32
    %c0_i32_0 = arith.constant 0 : i32
    %c0_i32_1 = arith.constant 0 : i32
    return %c0_i32, %c0_i32_0 : i32, i32
  }
  func.func @transform_3(%arg0: i32) -> (i32, i32) {
    %c0_i32 = arith.constant 0 : i32
    %c0_i32_0 = arith.constant 0 : i32
    %c0_i32_1 = arith.constant 0 : i32
    return %c0_i32, %c0_i32_0 : i32, i32
  }
  func.func @transform_4(%arg0: i32) -> (i32, i32) {
    %c0_i32 = arith.constant 0 : i32
    %c0_i32_0 = arith.constant 0 : i32
    %c0_i32_1 = arith.constant 0 : i32
    return %c0_i32, %c0_i32_0 : i32, i32
  }
  func.func @transform_5(%arg0: i32) -> (i32, i32) {
    %c0_i32 = arith.constant 0 : i32
    %c0_i32_0 = arith.constant 0 : i32
    %c0_i32_1 = arith.constant 0 : i32
    return %c0_i32, %c0_i32_0 : i32, i32
  }
  func.func @transform_6(%arg0: i32) -> (i32, i32) {
    %c0_i32 = arith.constant 0 : i32
    %c0_i32_0 = arith.constant 0 : i32
    %c0_i32_1 = arith.constant 0 : i32
    return %c0_i32, %c0_i32_0 : i32, i32
  }
  func.func @transform_7(%arg0: i32) -> (i32, i32) {
    %c0_i32 = arith.constant 0 : i32
    %c0_i32_0 = arith.constant 0 : i32
    %c0_i32_1 = arith.constant 0 : i32
    return %c0_i32, %c0_i32_0 : i32, i32
  }
  func.func @transform_8(%arg0: i32) -> (i32, i32) {
    %c0_i32 = arith.constant 0 : i32
    %c0_i32_0 = arith.constant 0 : i32
    %c0_i32_1 = arith.constant 0 : i32
    return %c0_i32, %c0_i32_0 : i32, i32
  }
  func.func @transform_9(%arg0: i32) -> (i32, i32) {
    %c0_i32 = arith.constant 0 : i32
    %c0_i32_0 = arith.constant 0 : i32
    %c0_i32_1 = arith.constant 0 : i32
    return %c0_i32, %c0_i32_0 : i32, i32
  }
  func.func @transform_10(%arg0: i32) -> (i32, i32) {
    %c0_i32 = arith.constant 0 : i32
    %c0_i32_0 = arith.constant 0 : i32
    %c0_i32_1 = arith.constant 0 : i32
    return %c0_i32, %c0_i32_0 : i32, i32
  }
  func.func @transform_11(%arg0: i32) -> (i32, i32, i32) {
    %c0_i32 = arith.constant 0 : i32
    %c0_i32_0 = arith.constant 0 : i32
    %c0_i32_1 = arith.constant 0 : i32
    %c0_i32_2 = arith.constant 0 : i32
    return %c0_i32, %c0_i32_0, %c0_i32_1 : i32, i32, i32
  }
}

</mosaic_0001>

<llo_original>
// kernel: my_rnn_forward.1
$region0: #{my_rnn_forward.1}
  #allocation0 [shape = 'u32[]', space=smem, size = 0x4, offset = 0x4, fixed_abs, tag = 'smem constant byte address 0x4 - core index']
  #allocation1 [shape = 'u32[144,128]{1,0:T(1,128)}', space=vmem, size = 0x12000, scoped, tag = 'internal scratch']
  %s0 = inlined_call_operand.vmem [shape: f32[2,8,4], index: 0, kind: input, shape index: {}]
  %s1 = inlined_call_operand.hbm [shape: f32[2,2,32], index: 1, kind: input, shape index: {}]
  %s2 = inlined_call_operand.vmem [shape: f32[4,32], index: 2, kind: input, shape index: {}]
  %s3 = inlined_call_operand.vmem [shape: f32[32,32], index: 3, kind: input, shape index: {}]
  %s4 = inlined_call_operand.vmem [shape: f32[1,32], index: 4, kind: input, shape index: {}]
  %s5 = inlined_call_operand.vmem [shape: f32[32,32], index: 5, kind: input, shape index: {}]
  %s6 = inlined_call_operand.hbm [shape: f32[32,32], index: 6, kind: input, shape index: {}]
  %s7 = inlined_call_operand.vmem [shape: f32[1,32], index: 7, kind: input, shape index: {}]
  %s8 = inlined_call_operand.vmem [shape: f32[32,3], index: 8, kind: input, shape index: {}]
  %s9 = inlined_call_operand.vmem [shape: f32[1,3], index: 9, kind: input, shape index: {}]
  %s10 = inlined_call_operand.hbm [shape: f32[2,3], index: 10, kind: output, shape index: {0}]
  %s11 = inlined_call_operand.hbm [shape: f32[2,2,32], index: 11, kind: output, shape index: {1}]
  %12 = xla_tuple %s10, %s11
  %s13 = sld [smem:[#allocation0]]
  $region70: #{my_rnn_forward.1} parent=0
    _
  %s15 = ssub.s32 1, %s13
  %s16 = scalar_select 0, %s15, %s13
  $region1: #{my_rnn_forward.1} parent=0
    #allocation2 [shape = 'u8[2048]{0}', space=vmem, size = 0x800, scoped, tag = 'input window, operand 1, single buffered']
    #allocation3 [shape = 's32[1]{0}', space=sflag, size = 0x4, scoped, tag = 'scoped memory for my_rnn_forward.1']
    #allocation4 [shape = 's32[1]{0}', space=sflag, size = 0x4, scoped, tag = 'scoped memory for my_rnn_forward.1']
    #allocation5 [shape = 'u8[16384]{0}', space=vmem, size = 0x4000, scoped, tag = 'input window, operand 6, single buffered']
    #allocation6 [shape = 's32[1]{0}', space=sflag, size = 0x4, scoped, tag = 'scoped memory for my_rnn_forward.1']
    #allocation7 [shape = 'u8[1024]{0}', space=vmem, size = 0x400, scoped, tag = 'output window, operand 0, single buffered']
    #allocation8 [shape = 'u8[2048]{0}', space=vmem, size = 0x800, scoped, tag = 'output window, operand 1, single buffered']
    #allocation9 [shape = 's32[1]{0}', space=sflag, size = 0x4, scoped, tag = 'scoped memory for my_rnn_forward.1']
    %17 = vsyncpa [#allocation3], 0
    %18 = vsyncpa [#allocation6], 0
    %19 = vsyncpa [#allocation4], 0
    %20 = vsyncpa [#allocation9], 0
    // Predicated region
    $region2: #{my_rnn_forward.1} parent=1 // pred_check
      _
    $region3: #{my_rnn_forward.1} parent=1 // pred_check_branch
      %22 = sbr.rel (0) target = $region5
    $region4: #{my_rnn_forward.1} parent=1 // pred_region
      _
    $region5: #{my_rnn_forward.1} parent=1 // pred_fallthru
      _
    // Predicated region
    $region6: #{my_rnn_forward.1} parent=1 // pred_check
      _
    $region7: #{my_rnn_forward.1} parent=1 // pred_check_branch
      %24 = sbr.rel (0) target = $region9
    $region8: #{my_rnn_forward.1} parent=1 // pred_region
      %s26 = ssub.s32 64, 64
      %27 = vsyncadd [#allocation3], %s26
      %s28 = sshll.u32 [#allocation2], 4
      %s29 = int_to_ptr.vmem [resolvable:$true] %s28
      %34 = dma.hbm_to_vmem [thread:$0]  %s1, 64, %s29, [#allocation3], 32, 32, 2
    $region9: #{my_rnn_forward.1} parent=1 // pred_fallthru
      _
    // Predicated region
    $region10: #{my_rnn_forward.1} parent=1 // pred_check
      _
    $region11: #{my_rnn_forward.1} parent=1 // pred_check_branch
      %36 = sbr.rel (0) target = $region13
    $region12: #{my_rnn_forward.1} parent=1 // pred_region
      _
    $region13: #{my_rnn_forward.1} parent=1 // pred_fallthru
      _
    // Predicated region
    $region14: #{my_rnn_forward.1} parent=1 // pred_check
      _
    $region15: #{my_rnn_forward.1} parent=1 // pred_check_branch
      %38 = sbr.rel (0) target = $region17
    $region16: #{my_rnn_forward.1} parent=1 // pred_region
      _
    $region17: #{my_rnn_forward.1} parent=1 // pred_fallthru
      _
    // Predicated region
    $region18: #{my_rnn_forward.1} parent=1 // pred_check
      _
    $region19: #{my_rnn_forward.1} parent=1 // pred_check_branch
      %40 = sbr.rel (0) target = $region21
    $region20: #{my_rnn_forward.1} parent=1 // pred_region
      _
    $region21: #{my_rnn_forward.1} parent=1 // pred_fallthru
      _
    // Predicated region
    $region22: #{my_rnn_forward.1} parent=1 // pred_check
      _
    $region23: #{my_rnn_forward.1} parent=1 // pred_check_branch
      %42 = sbr.rel (0) target = $region25
    $region24: #{my_rnn_forward.1} parent=1 // pred_region
      _
    $region25: #{my_rnn_forward.1} parent=1 // pred_fallthru
      _
    // Predicated region
    $region26: #{my_rnn_forward.1} parent=1 // pred_check
      _
    $region27: #{my_rnn_forward.1} parent=1 // pred_check_branch
      %44 = sbr.rel (0) target = $region29
    $region28: #{my_rnn_forward.1} parent=1 // pred_region
      %s46 = ssub.s32 512, 512
      %47 = vsyncadd [#allocation6], %s46
      %s48 = sshll.u32 [#allocation5], 4
      %s49 = int_to_ptr.vmem [resolvable:$true] %s48
      %54 = dma.hbm_to_vmem [thread:$0]  %s6, 512, %s49, [#allocation6], 128, 128, 8
    $region29: #{my_rnn_forward.1} parent=1 // pred_fallthru
      _
    // Predicated region
    $region30: #{my_rnn_forward.1} parent=1 // pred_check
      _
    $region31: #{my_rnn_forward.1} parent=1 // pred_check_branch
      %56 = sbr.rel (0) target = $region33
    $region32: #{my_rnn_forward.1} parent=1 // pred_region
      _
    $region33: #{my_rnn_forward.1} parent=1 // pred_fallthru
      _
    // Predicated region
    $region34: #{my_rnn_forward.1} parent=1 // pred_check
      _
    $region35: #{my_rnn_forward.1} parent=1 // pred_check_branch
      %58 = sbr.rel (0) target = $region37
    $region36: #{my_rnn_forward.1} parent=1 // pred_region
      _
    $region37: #{my_rnn_forward.1} parent=1 // pred_fallthru
      _
    // Predicated region
    $region38: #{my_rnn_forward.1} parent=1 // pred_check
      _
    $region39: #{my_rnn_forward.1} parent=1 // pred_check_branch
      %60 = sbr.rel (0) target = $region41
    $region40: #{my_rnn_forward.1} parent=1 // pred_region
      _
    $region41: #{my_rnn_forward.1} parent=1 // pred_fallthru
      _
    // Predicated region
    $region42: #{my_rnn_forward.1} parent=1 // pred_check
      _
    $region43: #{my_rnn_forward.1} parent=1 // pred_check_branch
      %62 = sbr.rel (0) target = $region45
    $region44: #{my_rnn_forward.1} parent=1 // pred_region
      %63 = dma.done [#allocation3], 64
    $region45: #{my_rnn_forward.1} parent=1 // pred_fallthru
      _
    // Predicated region
    $region46: #{my_rnn_forward.1} parent=1 // pred_check
      _
    $region47: #{my_rnn_forward.1} parent=1 // pred_check_branch
      %65 = sbr.rel (0) target = $region49
    $region48: #{my_rnn_forward.1} parent=1 // pred_region
      %66 = dma.done [#allocation6], 512
    $region49: #{my_rnn_forward.1} parent=1 // pred_fallthru
      _
    %v67 = vld [vmem:[%s2] sm:$0xf]
    %v68 = vld [vmem:[%s5] sm:$0xff]
    %v69 = vld [vmem:[%s5 + $0x8] sm:$0xff]
    %v70 = vld [vmem:[%s5 + $0x10] sm:$0xff]
    %v71 = vld [vmem:[%s5 + $0x18] sm:$0xff]
    %v72 = vld [vmem:[%s3] sm:$0xff]
    %v73 = vld [vmem:[%s3 + $0x8] sm:$0xff]
    %v74 = vld [vmem:[%s3 + $0x10] sm:$0xff]
    %v75 = vld [vmem:[%s3 + $0x18] sm:$0xff]
    %v76 = vld [vmem:[#allocation5] sm:$0xff]
    %v77 = vld [vmem:[#allocation5 + $0x8] sm:$0xff]
    %v78 = vld [vmem:[#allocation5 + $0x10] sm:$0xff]
    %v79 = vld [vmem:[#allocation5 + $0x18] sm:$0xff]
    %v80 = vld [vmem:[%s4] sm:$0x1]
    %v81 = vld [vmem:[%s7] sm:$0x1]
    %v82 = vld [vmem:[%s0] sm:$0xff]
    %v83 = vld [vmem:[%s0 + $0x8] sm:$0xff]
    %v84 = vld [vmem:[#allocation2] sm:$0x3]
    %s85 = scalar_lea.vmem [#allocation2], 2
    %v86 = vld [vmem:[%s85] sm:$0x3]
    %v88 = vlaneseq
    %v89 = vshrl.u32 %v88, 7
    %v90 = vsub.s32 0, %v89
    %v91 = vrot.slane %v80, %v90
    %v95 = vrot.slane %v83, 7
    %vm96 = vcmask 1041409
    %v97 = vsel %vm96, %v95, %v82
    %vm98 = vcmask 31744
    %v99 = vsel %vm98, %v97, 0
    %vm101 = vcmask 1043456
    %v103 = vsel %vm101, %v67, 0
    %105 = vmatprep.subr.mxu0 0.0
    %106 = vmatpush1.msra.mxu0 %v103
    %107 = vmatprep.subr.mxu0 0.0
    %108 = vmatpush1.msra.mxu0 0.0
    %109 = vmatprep.subr.mxu0 0.0
    %110 = vmatpush1.msra.mxu0 0.0
    %111 = vmatprep.subr.mxu0 0.0
    %112 = vmatpush1.msra.mxu0 0.0
    %113 = vmatprep.subr.mxu0 0.0
    %114 = vmatpush1.msra.mxu0 0.0
    %115 = vmatprep.subr.mxu0 0.0
    %116 = vmatpush1.msra.mxu0 0.0
    %117 = vmatprep.subr.mxu0 0.0
    %118 = vmatpush1.msra.mxu0 0.0
    %119 = vmatprep.subr.mxu0 0.0
    %120 = vmatpush1.msra.mxu0 0.0
    %121 = vmatprep.subr.mxu0 0.0
    %122 = vmatpush1.msra.mxu0 0.0
    %123 = vmatprep.subr.mxu0 0.0
    %124 = vmatpush1.msra.mxu0 0.0
    %125 = vmatprep.subr.mxu0 0.0
    %126 = vmatpush1.msra.mxu0 0.0
    %127 = vmatprep.subr.mxu0 0.0
    %128 = vmatpush1.msra.mxu0 0.0
    %129 = vmatprep.subr.mxu0 0.0
    %130 = vmatpush1.msra.mxu0 0.0
    %131 = vmatprep.subr.mxu0 0.0
    %132 = vmatpush1.msra.mxu0 0.0
    %133 = vmatprep.subr.mxu0 0.0
    %134 = vmatpush1.msra.mxu0 0.0
    %135 = vmatprep.subr.mxu0 0.0
    %136 = vmatpush1.msra.mxu0 0.0
    %137 = vmatprep.subr.mxu0 0.0
    %138 = vmatpush1.msra.mxu0 0.0
    %139 = vmatprep.subr.mxu0 0.0
    %140 = vmatpush1.msra.mxu0 0.0
    %141 = vmatprep.subr.mxu0 0.0
    %142 = vmatpush1.msra.mxu0 0.0
    %143 = vmatprep.subr.mxu0 0.0
    %144 = vmatpush1.msra.mxu0 0.0
    %145 = vmatprep.subr.mxu0 0.0
    %146 = vmatpush1.msra.mxu0 0.0
    %147 = vmatprep.subr.mxu0 0.0
    %148 = vmatpush1.msra.mxu0 0.0
    %149 = vmatprep.subr.mxu0 0.0
    %150 = vmatpush1.msra.mxu0 0.0
    %151 = vmatprep.subr.mxu0 0.0
    %152 = vmatpush1.msra.mxu0 0.0
    %153 = vmatprep.subr.mxu0 0.0
    %154 = vmatpush1.msra.mxu0 0.0
    %155 = vmatprep.subr.mxu0 0.0
    %156 = vmatpush1.msra.mxu0 0.0
    %157 = vmatprep.subr.mxu0 0.0
    %158 = vmatpush1.msra.mxu0 0.0
    %159 = vmatprep.subr.mxu0 0.0
    %160 = vmatpush1.msra.mxu0 0.0
    %161 = vmatprep.subr.mxu0 0.0
    %162 = vmatpush1.msra.mxu0 0.0
    %163 = vmatprep.subr.mxu0 0.0
    %164 = vmatpush1.msra.mxu0 0.0
    %165 = vmatprep.subr.mxu0 0.0
    %166 = vmatpush1.msra.mxu0 0.0
    %167 = vmatprep.subr.mxu0 0.0
    %168 = vmatpush1.msra.mxu0 0.0
    %169 = vmatprep.mubr.f32.mxu0 0.0
    %170 = vmatmul.mubr.f32.gmra.mrb[0].mxu0 %v99
    %v171 = vpop.f32.mrb[0].mxu0
    %v172 = vadd.f32 %v91, %v171
    %v173 = vpop.f32.mrb[0].mxu0
    %174 = vdwg.mxu0
    %v175 = vrot.slane %v82, 1
    %v176 = vsel %vm96, %v83, %v175
    %v177 = vsel %vm98, %v176, 0
    %179 = vmatprep.subr.mxu0 0.0
    %180 = vmatpush1.msra.mxu0 %v103
    %181 = vmatprep.subr.mxu0 0.0
    %182 = vmatpush1.msra.mxu0 0.0
    %183 = vmatprep.subr.mxu0 0.0
    %184 = vmatpush1.msra.mxu0 0.0
    %185 = vmatprep.subr.mxu0 0.0
    %186 = vmatpush1.msra.mxu0 0.0
    %187 = vmatprep.subr.mxu0 0.0
    %188 = vmatpush1.msra.mxu0 0.0
    %189 = vmatprep.subr.mxu0 0.0
    %190 = vmatpush1.msra.mxu0 0.0
    %191 = vmatprep.subr.mxu0 0.0
    %192 = vmatpush1.msra.mxu0 0.0
    %193 = vmatprep.subr.mxu0 0.0
    %194 = vmatpush1.msra.mxu0 0.0
    %195 = vmatprep.subr.mxu0 0.0
    %196 = vmatpush1.msra.mxu0 0.0
    %197 = vmatprep.subr.mxu0 0.0
    %198 = vmatpush1.msra.mxu0 0.0
    %199 = vmatprep.subr.mxu0 0.0
    %200 = vmatpush1.msra.mxu0 0.0
    %201 = vmatprep.subr.mxu0 0.0
    %202 = vmatpush1.msra.mxu0 0.0
    %203 = vmatprep.subr.mxu0 0.0
    %204 = vmatpush1.msra.mxu0 0.0
    %205 = vmatprep.subr.mxu0 0.0
    %206 = vmatpush1.msra.mxu0 0.0
    %207 = vmatprep.subr.mxu0 0.0
    %208 = vmatpush1.msra.mxu0 0.0
    %209 = vmatprep.subr.mxu0 0.0
    %210 = vmatpush1.msra.mxu0 0.0
    %211 = vmatprep.subr.mxu0 0.0
    %212 = vmatpush1.msra.mxu0 0.0
    %213 = vmatprep.subr.mxu0 0.0
    %214 = vmatpush1.msra.mxu0 0.0
    %215 = vmatprep.subr.mxu0 0.0
    %216 = vmatpush1.msra.mxu0 0.0
    %217 = vmatprep.subr.mxu0 0.0
    %218 = vmatpush1.msra.mxu0 0.0
    %219 = vmatprep.subr.mxu0 0.0
    %220 = vmatpush1.msra.mxu0 0.0
    %221 = vmatprep.subr.mxu0 0.0
    %222 = vmatpush1.msra.mxu0 0.0
    %223 = vmatprep.subr.mxu0 0.0
    %224 = vmatpush1.msra.mxu0 0.0
    %225 = vmatprep.subr.mxu0 0.0
    %226 = vmatpush1.msra.mxu0 0.0
    %227 = vmatprep.subr.mxu0 0.0
    %228 = vmatpush1.msra.mxu0 0.0
    %229 = vmatprep.subr.mxu0 0.0
    %230 = vmatpush1.msra.mxu0 0.0
    %231 = vmatprep.subr.mxu0 0.0
    %232 = vmatpush1.msra.mxu0 0.0
    %233 = vmatprep.subr.mxu0 0.0
    %234 = vmatpush1.msra.mxu0 0.0
    %235 = vmatprep.subr.mxu0 0.0
    %236 = vmatpush1.msra.mxu0 0.0
    %237 = vmatprep.subr.mxu0 0.0
    %238 = vmatpush1.msra.mxu0 0.0
    %239 = vmatprep.subr.mxu0 0.0
    %240 = vmatpush1.msra.mxu0 0.0
    %241 = vmatprep.subr.mxu0 0.0
    %242 = vmatpush1.msra.mxu0 0.0
    %243 = vmatprep.mubr.f32.mxu0 0.0
    %244 = vmatmul.mubr.f32.gmra.mrb[0].mxu0 %v177
    %v245 = vpop.f32.mrb[0].mxu0
    %v246 = vadd.f32 %v91, %v245
    %v247 = vpop.f32.mrb[0].mxu0
    %248 = vdwg.mxu0
    %v249 = vrot.slane %v82, 2
    %v250 = vrot.slane %v83, 1
    %v251 = vsel %vm96, %v250, %v249
    %v252 = vsel %vm98, %v251, 0
    %254 = vmatprep.subr.mxu0 0.0
    %255 = vmatpush1.msra.mxu0 %v103
    %256 = vmatprep.subr.mxu0 0.0
    %257 = vmatpush1.msra.mxu0 0.0
    %258 = vmatprep.subr.mxu0 0.0
    %259 = vmatpush1.msra.mxu0 0.0
    %260 = vmatprep.subr.mxu0 0.0
    %261 = vmatpush1.msra.mxu0 0.0
    %262 = vmatprep.subr.mxu0 0.0
    %263 = vmatpush1.msra.mxu0 0.0
    %264 = vmatprep.subr.mxu0 0.0
    %265 = vmatpush1.msra.mxu0 0.0
    %266 = vmatprep.subr.mxu0 0.0
    %267 = vmatpush1.msra.mxu0 0.0
    %268 = vmatprep.subr.mxu0 0.0
    %269 = vmatpush1.msra.mxu0 0.0
    %270 = vmatprep.subr.mxu0 0.0
    %271 = vmatpush1.msra.mxu0 0.0
    %272 = vmatprep.subr.mxu0 0.0
    %273 = vmatpush1.msra.mxu0 0.0
    %274 = vmatprep.subr.mxu0 0.0
    %275 = vmatpush1.msra.mxu0 0.0
    %276 = vmatprep.subr.mxu0 0.0
    %277 = vmatpush1.msra.mxu0 0.0
    %278 = vmatprep.subr.mxu0 0.0
    %279 = vmatpush1.msra.mxu0 0.0
    %280 = vmatprep.subr.mxu0 0.0
    %281 = vmatpush1.msra.mxu0 0.0
    %282 = vmatprep.subr.mxu0 0.0
    %283 = vmatpush1.msra.mxu0 0.0
    %284 = vmatprep.subr.mxu0 0.0
    %285 = vmatpush1.msra.mxu0 0.0
    %286 = vmatprep.subr.mxu0 0.0
    %287 = vmatpush1.msra.mxu0 0.0
    %288 = vmatprep.subr.mxu0 0.0
    %289 = vmatpush1.msra.mxu0 0.0
    %290 = vmatprep.subr.mxu0 0.0
    %291 = vmatpush1.msra.mxu0 0.0
    %292 = vmatprep.subr.mxu0 0.0
    %293 = vmatpush1.msra.mxu0 0.0
    %294 = vmatprep.subr.mxu0 0.0
    %295 = vmatpush1.msra.mxu0 0.0
    %296 = vmatprep.subr.mxu0 0.0
    %297 = vmatpush1.msra.mxu0 0.0
    %298 = vmatprep.subr.mxu0 0.0
    %299 = vmatpush1.msra.mxu0 0.0
    %300 = vmatprep.subr.mxu0 0.0
    %301 = vmatpush1.msra.mxu0 0.0
    %302 = vmatprep.subr.mxu0 0.0
    %303 = vmatpush1.msra.mxu0 0.0
    %304 = vmatprep.subr.mxu0 0.0
    %305 = vmatpush1.msra.mxu0 0.0
    %306 = vmatprep.subr.mxu0 0.0
    %307 = vmatpush1.msra.mxu0 0.0
    %308 = vmatprep.subr.mxu0 0.0
    %309 = vmatpush1.msra.mxu0 0.0
    %310 = vmatprep.subr.mxu0 0.0
    %311 = vmatpush1.msra.mxu0 0.0
    %312 = vmatprep.subr.mxu0 0.0
    %313 = vmatpush1.msra.mxu0 0.0
    %314 = vmatprep.subr.mxu0 0.0
    %315 = vmatpush1.msra.mxu0 0.0
    %316 = vmatprep.subr.mxu0 0.0
    %317 = vmatpush1.msra.mxu0 0.0
    %318 = vmatprep.mubr.f32.mxu0 0.0
    %319 = vmatmul.mubr.f32.gmra.mrb[0].mxu0 %v252
    %v320 = vpop.f32.mrb[0].mxu0
    %v321 = vadd.f32 %v91, %v320
    %v322 = vpop.f32.mrb[0].mxu0
    %323 = vdwg.mxu0
    %v324 = vrot.slane %v82, 3
    %v325 = vrot.slane %v83, 2
    %v326 = vsel %vm96, %v325, %v324
    %v327 = vsel %vm98, %v326, 0
    %329 = vmatprep.subr.mxu0 0.0
    %330 = vmatpush1.msra.mxu0 %v103
    %331 = vmatprep.subr.mxu0 0.0
    %332 = vmatpush1.msra.mxu0 0.0
    %333 = vmatprep.subr.mxu0 0.0
    %334 = vmatpush1.msra.mxu0 0.0
    %335 = vmatprep.subr.mxu0 0.0
    %336 = vmatpush1.msra.mxu0 0.0
    %337 = vmatprep.subr.mxu0 0.0
    %338 = vmatpush1.msra.mxu0 0.0
    %339 = vmatprep.subr.mxu0 0.0
    %340 = vmatpush1.msra.mxu0 0.0
    %341 = vmatprep.subr.mxu0 0.0
    %342 = vmatpush1.msra.mxu0 0.0
    %343 = vmatprep.subr.mxu0 0.0
    %344 = vmatpush1.msra.mxu0 0.0
    %345 = vmatprep.subr.mxu0 0.0
    %346 = vmatpush1.msra.mxu0 0.0
    %347 = vmatprep.subr.mxu0 0.0
    %348 = vmatpush1.msra.mxu0 0.0
    %349 = vmatprep.subr.mxu0 0.0
    %350 = vmatpush1.msra.mxu0 0.0
    %351 = vmatprep.subr.mxu0 0.0
    %352 = vmatpush1.msra.mxu0 0.0
    %353 = vmatprep.subr.mxu0 0.0
    %354 = vmatpush1.msra.mxu0 0.0
    %355 = vmatprep.subr.mxu0 0.0
    %356 = vmatpush1.msra.mxu0 0.0
    %357 = vmatprep.subr.mxu0 0.0
    %358 = vmatpush1.msra.mxu0 0.0
    %359 = vmatprep.subr.mxu0 0.0
    %360 = vmatpush1.msra.mxu0 0.0
    %361 = vmatprep.subr.mxu0 0.0
    %362 = vmatpush1.msra.mxu0 0.0
    %363 = vmatprep.subr.mxu0 0.0
    %364 = vmatpush1.msra.mxu0 0.0
    %365 = vmatprep.subr.mxu0 0.0
    %366 = vmatpush1.msra.mxu0 0.0
    %367 = vmatprep.subr.mxu0 0.0
    %368 = vmatpush1.msra.mxu0 0.0
    %369 = vmatprep.subr.mxu0 0.0
    %370 = vmatpush1.msra.mxu0 0.0
    %371 = vmatprep.subr.mxu0 0.0
    %372 = vmatpush1.msra.mxu0 0.0
    %373 = vmatprep.subr.mxu0 0.0
    %374 = vmatpush1.msra.mxu0 0.0
    %375 = vmatprep.subr.mxu0 0.0
    %376 = vmatpush1.msra.mxu0 0.0
    %377 = vmatprep.subr.mxu0 0.0
    %378 = vmatpush1.msra.mxu0 0.0
    %379 = vmatprep.subr.mxu0 0.0
    %380 = vmatpush1.msra.mxu0 0.0
    %381 = vmatprep.subr.mxu0 0.0
    %382 = vmatpush1.msra.mxu0 0.0
    %383 = vmatprep.subr.mxu0 0.0
    %384 = vmatpush1.msra.mxu0 0.0
    %385 = vmatprep.subr.mxu0 0.0
    %386 = vmatpush1.msra.mxu0 0.0
    %387 = vmatprep.subr.mxu0 0.0
    %388 = vmatpush1.msra.mxu0 0.0
    %389 = vmatprep.subr.mxu0 0.0
    %390 = vmatpush1.msra.mxu0 0.0
    %391 = vmatprep.subr.mxu0 0.0
    %392 = vmatpush1.msra.mxu0 0.0
    %393 = vmatprep.mubr.f32.mxu0 0.0
    %394 = vmatmul.mubr.f32.gmra.mrb[0].mxu0 %v327
    %v395 = vpop.f32.mrb[0].mxu0
    %v396 = vadd.f32 %v91, %v395
    %v397 = vpop.f32.mrb[0].mxu0
    %398 = vdwg.mxu0
    %v399 = vrot.slane %v82, 4
    %v400 = vrot.slane %v83, 3
    %v401 = vsel %vm96, %v400, %v399
    %v402 = vsel %vm98, %v401, 0
    %404 = vmatprep.subr.mxu0 0.0
    %405 = vmatpush1.msra.mxu0 %v103
    %406 = vmatprep.subr.mxu0 0.0
    %407 = vmatpush1.msra.mxu0 0.0
    %408 = vmatprep.subr.mxu0 0.0
    %409 = vmatpush1.msra.mxu0 0.0
    %410 = vmatprep.subr.mxu0 0.0
    %411 = vmatpush1.msra.mxu0 0.0
    %412 = vmatprep.subr.mxu0 0.0
    %413 = vmatpush1.msra.mxu0 0.0
    %414 = vmatprep.subr.mxu0 0.0
    %415 = vmatpush1.msra.mxu0 0.0
    %416 = vmatprep.subr.mxu0 0.0
    %417 = vmatpush1.msra.mxu0 0.0
    %418 = vmatprep.subr.mxu0 0.0
    %419 = vmatpush1.msra.mxu0 0.0
    %420 = vmatprep.subr.mxu0 0.0
    %421 = vmatpush1.msra.mxu0 0.0
    %422 = vmatprep.subr.mxu0 0.0
    %423 = vmatpush1.msra.mxu0 0.0
    %424 = vmatprep.subr.mxu0 0.0
    %425 = vmatpush1.msra.mxu0 0.0
    %426 = vmatprep.subr.mxu0 0.0
    %427 = vmatpush1.msra.mxu0 0.0
    %428 = vmatprep.subr.mxu0 0.0
    %429 = vmatpush1.msra.mxu0 0.0
    %430 = vmatprep.subr.mxu0 0.0
    %431 = vmatpush1.msra.mxu0 0.0
    %432 = vmatprep.subr.mxu0 0.0
    %433 = vmatpush1.msra.mxu0 0.0
    %434 = vmatprep.subr.mxu0 0.0
    %435 = vmatpush1.msra.mxu0 0.0
    %436 = vmatprep.subr.mxu0 0.0
    %437 = vmatpush1.msra.mxu0 0.0
    %438 = vmatprep.subr.mxu0 0.0
    %439 = vmatpush1.msra.mxu0 0.0
    %440 = vmatprep.subr.mxu0 0.0
    %441 = vmatpush1.msra.mxu0 0.0
    %442 = vmatprep.subr.mxu0 0.0
    %443 = vmatpush1.msra.mxu0 0.0
    %444 = vmatprep.subr.mxu0 0.0
    %445 = vmatpush1.msra.mxu0 0.0
    %446 = vmatprep.subr.mxu0 0.0
    %447 = vmatpush1.msra.mxu0 0.0
    %448 = vmatprep.subr.mxu0 0.0
    %449 = vmatpush1.msra.mxu0 0.0
    %450 = vmatprep.subr.mxu0 0.0
    %451 = vmatpush1.msra.mxu0 0.0
    %452 = vmatprep.subr.mxu0 0.0
    %453 = vmatpush1.msra.mxu0 0.0
    %454 = vmatprep.subr.mxu0 0.0
    %455 = vmatpush1.msra.mxu0 0.0
    %456 = vmatprep.subr.mxu0 0.0
    %457 = vmatpush1.msra.mxu0 0.0
    %458 = vmatprep.subr.mxu0 0.0
    %459 = vmatpush1.msra.mxu0 0.0
    %460 = vmatprep.subr.mxu0 0.0
    %461 = vmatpush1.msra.mxu0 0.0
    %462 = vmatprep.subr.mxu0 0.0
    %463 = vmatpush1.msra.mxu0 0.0
    %464 = vmatprep.subr.mxu0 0.0
    %465 = vmatpush1.msra.mxu0 0.0
    %466 = vmatprep.subr.mxu0 0.0
    %467 = vmatpush1.msra.mxu0 0.0
    %468 = vmatprep.mubr.f32.mxu0 0.0
    %469 = vmatmul.mubr.f32.gmra.mrb[0].mxu0 %v402
    %v470 = vpop.f32.mrb[0].mxu0
    %v471 = vadd.f32 %v91, %v470
    %v472 = vpop.f32.mrb[0].mxu0
    %473 = vdwg.mxu0
    %v474 = vrot.slane %v82, 5
    %v475 = vrot.slane %v83, 4
    %v476 = vsel %vm96, %v475, %v474
    %v477 = vsel %vm98, %v476, 0
    %479 = vmatprep.subr.mxu0 0.0
    %480 = vmatpush1.msra.mxu0 %v103
    %481 = vmatprep.subr.mxu0 0.0
    %482 = vmatpush1.msra.mxu0 0.0
    %483 = vmatprep.subr.mxu0 0.0
    %484 = vmatpush1.msra.mxu0 0.0
    %485 = vmatprep.subr.mxu0 0.0
    %486 = vmatpush1.msra.mxu0 0.0
    %487 = vmatprep.subr.mxu0 0.0
    %488 = vmatpush1.msra.mxu0 0.0
    %489 = vmatprep.subr.mxu0 0.0
    %490 = vmatpush1.msra.mxu0 0.0
    %491 = vmatprep.subr.mxu0 0.0
    %492 = vmatpush1.msra.mxu0 0.0
    %493 = vmatprep.subr.mxu0 0.0
    %494 = vmatpush1.msra.mxu0 0.0
    %495 = vmatprep.subr.mxu0 0.0
    %496 = vmatpush1.msra.mxu0 0.0
    %497 = vmatprep.subr.mxu0 0.0
    %498 = vmatpush1.msra.mxu0 0.0
    %499 = vmatprep.subr.mxu0 0.0
    %500 = vmatpush1.msra.mxu0 0.0
    %501 = vmatprep.subr.mxu0 0.0
    %502 = vmatpush1.msra.mxu0 0.0
    %503 = vmatprep.subr.mxu0 0.0
    %504 = vmatpush1.msra.mxu0 0.0
    %505 = vmatprep.subr.mxu0 0.0
    %506 = vmatpush1.msra.mxu0 0.0
    %507 = vmatprep.subr.mxu0 0.0
    %508 = vmatpush1.msra.mxu0 0.0
    %509 = vmatprep.subr.mxu0 0.0
    %510 = vmatpush1.msra.mxu0 0.0
    %511 = vmatprep.subr.mxu0 0.0
    %512 = vmatpush1.msra.mxu0 0.0
    %513 = vmatprep.subr.mxu0 0.0
    %514 = vmatpush1.msra.mxu0 0.0
    %515 = vmatprep.subr.mxu0 0.0
    %516 = vmatpush1.msra.mxu0 0.0
    %517 = vmatprep.subr.mxu0 0.0
    %518 = vmatpush1.msra.mxu0 0.0
    %519 = vmatprep.subr.mxu0 0.0
    %520 = vmatpush1.msra.mxu0 0.0
    %521 = vmatprep.subr.mxu0 0.0
    %522 = vmatpush1.msra.mxu0 0.0
    %523 = vmatprep.subr.mxu0 0.0
    %524 = vmatpush1.msra.mxu0 0.0
    %525 = vmatprep.subr.mxu0 0.0
    %526 = vmatpush1.msra.mxu0 0.0
    %527 = vmatprep.subr.mxu0 0.0
    %528 = vmatpush1.msra.mxu0 0.0
    %529 = vmatprep.subr.mxu0 0.0
    %530 = vmatpush1.msra.mxu0 0.0
    %531 = vmatprep.subr.mxu0 0.0
    %532 = vmatpush1.msra.mxu0 0.0
    %533 = vmatprep.subr.mxu0 0.0
    %534 = vmatpush1.msra.mxu0 0.0
    %535 = vmatprep.subr.mxu0 0.0
    %536 = vmatpush1.msra.mxu0 0.0
    %537 = vmatprep.subr.mxu0 0.0
    %538 = vmatpush1.msra.mxu0 0.0
    %539 = vmatprep.subr.mxu0 0.0
    %540 = vmatpush1.msra.mxu0 0.0
    %541 = vmatprep.subr.mxu0 0.0
    %542 = vmatpush1.msra.mxu0 0.0
    %543 = vmatprep.mubr.f32.mxu0 0.0
    %544 = vmatmul.mubr.f32.gmra.mrb[0].mxu0 %v477
    %v545 = vpop.f32.mrb[0].mxu0
    %v546 = vadd.f32 %v91, %v545
    %v547 = vpop.f32.mrb[0].mxu0
    %548 = vdwg.mxu0
    %v549 = vrot.slane %v82, 6
    %v550 = vrot.slane %v83, 5
    %v551 = vsel %vm96, %v550, %v549
    %v552 = vsel %vm98, %v551, 0
    %554 = vmatprep.subr.mxu0 0.0
    %555 = vmatpush1.msra.mxu0 %v103
    %556 = vmatprep.subr.mxu0 0.0
    %557 = vmatpush1.msra.mxu0 0.0
    %558 = vmatprep.subr.mxu0 0.0
    %559 = vmatpush1.msra.mxu0 0.0
    %560 = vmatprep.subr.mxu0 0.0
    %561 = vmatpush1.msra.mxu0 0.0
    %562 = vmatprep.subr.mxu0 0.0
    %563 = vmatpush1.msra.mxu0 0.0
    %564 = vmatprep.subr.mxu0 0.0
    %565 = vmatpush1.msra.mxu0 0.0
    %566 = vmatprep.subr.mxu0 0.0
    %567 = vmatpush1.msra.mxu0 0.0
    %568 = vmatprep.subr.mxu0 0.0
    %569 = vmatpush1.msra.mxu0 0.0
    %570 = vmatprep.subr.mxu0 0.0
    %571 = vmatpush1.msra.mxu0 0.0
    %572 = vmatprep.subr.mxu0 0.0
    %573 = vmatpush1.msra.mxu0 0.0
    %574 = vmatprep.subr.mxu0 0.0
    %575 = vmatpush1.msra.mxu0 0.0
    %576 = vmatprep.subr.mxu0 0.0
    %577 = vmatpush1.msra.mxu0 0.0
    %578 = vmatprep.subr.mxu0 0.0
    %579 = vmatpush1.msra.mxu0 0.0
    %580 = vmatprep.subr.mxu0 0.0
    %581 = vmatpush1.msra.mxu0 0.0
    %582 = vmatprep.subr.mxu0 0.0
    %583 = vmatpush1.msra.mxu0 0.0
    %584 = vmatprep.subr.mxu0 0.0
    %585 = vmatpush1.msra.mxu0 0.0
    %586 = vmatprep.subr.mxu0 0.0
    %587 = vmatpush1.msra.mxu0 0.0
    %588 = vmatprep.subr.mxu0 0.0
    %589 = vmatpush1.msra.mxu0 0.0
    %590 = vmatprep.subr.mxu0 0.0
    %591 = vmatpush1.msra.mxu0 0.0
    %592 = vmatprep.subr.mxu0 0.0
    %593 = vmatpush1.msra.mxu0 0.0
    %594 = vmatprep.subr.mxu0 0.0
    %595 = vmatpush1.msra.mxu0 0.0
    %596 = vmatprep.subr.mxu0 0.0
    %597 = vmatpush1.msra.mxu0 0.0
    %598 = vmatprep.subr.mxu0 0.0
    %599 = vmatpush1.msra.mxu0 0.0
    %600 = vmatprep.subr.mxu0 0.0
    %601 = vmatpush1.msra.mxu0 0.0
    %602 = vmatprep.subr.mxu0 0.0
    %603 = vmatpush1.msra.mxu0 0.0
    %604 = vmatprep.subr.mxu0 0.0
    %605 = vmatpush1.msra.mxu0 0.0
    %606 = vmatprep.subr.mxu0 0.0
    %607 = vmatpush1.msra.mxu0 0.0
    %608 = vmatprep.subr.mxu0 0.0
    %609 = vmatpush1.msra.mxu0 0.0
    %610 = vmatprep.subr.mxu0 0.0
    %611 = vmatpush1.msra.mxu0 0.0
    %612 = vmatprep.subr.mxu0 0.0
    %613 = vmatpush1.msra.mxu0 0.0
    %614 = vmatprep.subr.mxu0 0.0
    %615 = vmatpush1.msra.mxu0 0.0
    %616 = vmatprep.subr.mxu0 0.0
    %617 = vmatpush1.msra.mxu0 0.0
    %618 = vmatprep.mubr.f32.mxu0 0.0
    %619 = vmatmul.mubr.f32.gmra.mrb[0].mxu0 %v552
    %v620 = vpop.f32.mrb[0].mxu0
    %v621 = vadd.f32 %v91, %v620
    %v622 = vpop.f32.mrb[0].mxu0
    %623 = vdwg.mxu0
    %v624 = vrot.slane %v82, 7
    %v625 = vrot.slane %v83, 6
    %v626 = vsel %vm96, %v625, %v624
    %v627 = vsel %vm98, %v626, 0
    %629 = vmatprep.subr.mxu0 0.0
    %630 = vmatpush1.msra.mxu0 %v103
    %631 = vmatprep.subr.mxu0 0.0
    %632 = vmatpush1.msra.mxu0 0.0
    %633 = vmatprep.subr.mxu0 0.0
    %634 = vmatpush1.msra.mxu0 0.0
    %635 = vmatprep.subr.mxu0 0.0
    %636 = vmatpush1.msra.mxu0 0.0
    %637 = vmatprep.subr.mxu0 0.0
    %638 = vmatpush1.msra.mxu0 0.0
    %639 = vmatprep.subr.mxu0 0.0
    %640 = vmatpush1.msra.mxu0 0.0
    %641 = vmatprep.subr.mxu0 0.0
    %642 = vmatpush1.msra.mxu0 0.0
    %643 = vmatprep.subr.mxu0 0.0
    %644 = vmatpush1.msra.mxu0 0.0
    %645 = vmatprep.subr.mxu0 0.0
    %646 = vmatpush1.msra.mxu0 0.0
    %647 = vmatprep.subr.mxu0 0.0
    %648 = vmatpush1.msra.mxu0 0.0
    %649 = vmatprep.subr.mxu0 0.0
    %650 = vmatpush1.msra.mxu0 0.0
    %651 = vmatprep.subr.mxu0 0.0
    %652 = vmatpush1.msra.mxu0 0.0
    %653 = vmatprep.subr.mxu0 0.0
    %654 = vmatpush1.msra.mxu0 0.0
    %655 = vmatprep.subr.mxu0 0.0
    %656 = vmatpush1.msra.mxu0 0.0
    %657 = vmatprep.subr.mxu0 0.0
    %658 = vmatpush1.msra.mxu0 0.0
    %659 = vmatprep.subr.mxu0 0.0
    %660 = vmatpush1.msra.mxu0 0.0
    %661 = vmatprep.subr.mxu0 0.0
    %662 = vmatpush1.msra.mxu0 0.0
    %663 = vmatprep.subr.mxu0 0.0
    %664 = vmatpush1.msra.mxu0 0.0
    %665 = vmatprep.subr.mxu0 0.0
    %666 = vmatpush1.msra.mxu0 0.0
    %667 = vmatprep.subr.mxu0 0.0
    %668 = vmatpush1.msra.mxu0 0.0
    %669 = vmatprep.subr.mxu0 0.0
    %670 = vmatpush1.msra.mxu0 0.0
    %671 = vmatprep.subr.mxu0 0.0
    %672 = vmatpush1.msra.mxu0 0.0
    %673 = vmatprep.subr.mxu0 0.0
    %674 = vmatpush1.msra.mxu0 0.0
    %675 = vmatprep.subr.mxu0 0.0
    %676 = vmatpush1.msra.mxu0 0.0
    %677 = vmatprep.subr.mxu0 0.0
    %678 = vmatpush1.msra.mxu0 0.0
    %679 = vmatprep.subr.mxu0 0.0
    %680 = vmatpush1.msra.mxu0 0.0
    %681 = vmatprep.subr.mxu0 0.0
    %682 = vmatpush1.msra.mxu0 0.0
    %683 = vmatprep.subr.mxu0 0.0
    %684 = vmatpush1.msra.mxu0 0.0
    %685 = vmatprep.subr.mxu0 0.0
    %686 = vmatpush1.msra.mxu0 0.0
    %687 = vmatprep.subr.mxu0 0.0
    %688 = vmatpush1.msra.mxu0 0.0
    %689 = vmatprep.subr.mxu0 0.0
    %690 = vmatpush1.msra.mxu0 0.0
    %691 = vmatprep.subr.mxu0 0.0
    %692 = vmatpush1.msra.mxu0 0.0
    %693 = vmatprep.mubr.f32.mxu0 0.0
    %694 = vmatmul.mubr.f32.gmra.mrb[0].mxu0 %v627
    %v695 = vpop.f32.mrb[0].mxu0
    %v696 = vadd.f32 %v91, %v695
    %v697 = vpop.f32.mrb[0].mxu0
    %698 = vdwg.mxu0
    %vm699 = vcmask 261120
    %v701 = vsel %vm699, %v84, 0
    %703 = vmatprep.subr.mxu0 0.0
    %704 = vmatpush1.msra.mxu0 %v72
    %705 = vmatprep.subr.mxu0 0.0
    %706 = vmatpush1.msra.mxu0 %v73
    %707 = vmatprep.subr.mxu0 0.0
    %708 = vmatpush1.msra.mxu0 %v74
    %709 = vmatprep.subr.mxu0 0.0
    %710 = vmatpush1.msra.mxu0 %v75
    %711 = vmatprep.subr.mxu0 0.0
    %712 = vmatpush1.msra.mxu0 0.0
    %713 = vmatprep.subr.mxu0 0.0
    %714 = vmatpush1.msra.mxu0 0.0
    %715 = vmatprep.subr.mxu0 0.0
    %716 = vmatpush1.msra.mxu0 0.0
    %717 = vmatprep.subr.mxu0 0.0
    %718 = vmatpush1.msra.mxu0 0.0
    %719 = vmatprep.subr.mxu0 0.0
    %720 = vmatpush1.msra.mxu0 0.0
    %721 = vmatprep.subr.mxu0 0.0
    %722 = vmatpush1.msra.mxu0 0.0
    %723 = vmatprep.subr.mxu0 0.0
    %724 = vmatpush1.msra.mxu0 0.0
    %725 = vmatprep.subr.mxu0 0.0
    %726 = vmatpush1.msra.mxu0 0.0
    %727 = vmatprep.subr.mxu0 0.0
    %728 = vmatpush1.msra.mxu0 0.0
    %729 = vmatprep.subr.mxu0 0.0
    %730 = vmatpush1.msra.mxu0 0.0
    %731 = vmatprep.subr.mxu0 0.0
    %732 = vmatpush1.msra.mxu0 0.0
    %733 = vmatprep.subr.mxu0 0.0
    %734 = vmatpush1.msra.mxu0 0.0
    %735 = vmatprep.subr.mxu0 0.0
    %736 = vmatpush1.msra.mxu0 0.0
    %737 = vmatprep.subr.mxu0 0.0
    %738 = vmatpush1.msra.mxu0 0.0
    %739 = vmatprep.subr.mxu0 0.0
    %740 = vmatpush1.msra.mxu0 0.0
    %741 = vmatprep.subr.mxu0 0.0
    %742 = vmatpush1.msra.mxu0 0.0
    %743 = vmatprep.subr.mxu0 0.0
    %744 = vmatpush1.msra.mxu0 0.0
    %745 = vmatprep.subr.mxu0 0.0
    %746 = vmatpush1.msra.mxu0 0.0
    %747 = vmatprep.subr.mxu0 0.0
    %748 = vmatpush1.msra.mxu0 0.0
    %749 = vmatprep.subr.mxu0 0.0
    %750 = vmatpush1.msra.mxu0 0.0
    %751 = vmatprep.subr.mxu0 0.0
    %752 = vmatpush1.msra.mxu0 0.0
    %753 = vmatprep.subr.mxu0 0.0
    %754 = vmatpush1.msra.mxu0 0.0
    %755 = vmatprep.subr.mxu0 0.0
    %756 = vmatpush1.msra.mxu0 0.0
    %757 = vmatprep.subr.mxu0 0.0
    %758 = vmatpush1.msra.mxu0 0.0
    %759 = vmatprep.subr.mxu0 0.0
    %760 = vmatpush1.msra.mxu0 0.0
    %761 = vmatprep.subr.mxu0 0.0
    %762 = vmatpush1.msra.mxu0 0.0
    %763 = vmatprep.subr.mxu0 0.0
    %764 = vmatpush1.msra.mxu0 0.0
    %765 = vmatprep.subr.mxu0 0.0
    %766 = vmatpush1.msra.mxu0 0.0
    %767 = vmatprep.mubr.f32.mxu0 0.0
    %768 = vmatmul.mubr.f32.gmra.mrb[0].mxu0 %v701
    %v769 = vpop.f32.mrb[0].mxu0
    %v770 = vadd.f32 0.0, %v769
    %v771 = vpop.f32.mrb[0].mxu0
    %772 = vdwg.mxu0
    %v773 = vadd.f32 %v172, %v770
    %v774 = vtanh.pop %v773
    %v776 = vsel %vm699, %v86, 0
    %778 = vmatprep.subr.mxu0 0.0
    %779 = vmatpush1.msra.mxu0 %v76
    %780 = vmatprep.subr.mxu0 0.0
    %781 = vmatpush1.msra.mxu0 %v77
    %782 = vmatprep.subr.mxu0 0.0
    %783 = vmatpush1.msra.mxu0 %v78
    %784 = vmatprep.subr.mxu0 0.0
    %785 = vmatpush1.msra.mxu0 %v79
    %786 = vmatprep.subr.mxu0 0.0
    %787 = vmatpush1.msra.mxu0 0.0
    %788 = vmatprep.subr.mxu0 0.0
    %789 = vmatpush1.msra.mxu0 0.0
    %790 = vmatprep.subr.mxu0 0.0
    %791 = vmatpush1.msra.mxu0 0.0
    %792 = vmatprep.subr.mxu0 0.0
    %793 = vmatpush1.msra.mxu0 0.0
    %794 = vmatprep.subr.mxu0 0.0
    %795 = vmatpush1.msra.mxu0 0.0
    %796 = vmatprep.subr.mxu0 0.0
    %797 = vmatpush1.msra.mxu0 0.0
    %798 = vmatprep.subr.mxu0 0.0
    %799 = vmatpush1.msra.mxu0 0.0
    %800 = vmatprep.subr.mxu0 0.0
    %801 = vmatpush1.msra.mxu0 0.0
    %802 = vmatprep.subr.mxu0 0.0
    %803 = vmatpush1.msra.mxu0 0.0
    %804 = vmatprep.subr.mxu0 0.0
    %805 = vmatpush1.msra.mxu0 0.0
    %806 = vmatprep.subr.mxu0 0.0
    %807 = vmatpush1.msra.mxu0 0.0
    %808 = vmatprep.subr.mxu0 0.0
    %809 = vmatpush1.msra.mxu0 0.0
    %810 = vmatprep.subr.mxu0 0.0
    %811 = vmatpush1.msra.mxu0 0.0
    %812 = vmatprep.subr.mxu0 0.0
    %813 = vmatpush1.msra.mxu0 0.0
    %814 = vmatprep.subr.mxu0 0.0
    %815 = vmatpush1.msra.mxu0 0.0
    %816 = vmatprep.subr.mxu0 0.0
    %817 = vmatpush1.msra.mxu0 0.0
    %818 = vmatprep.subr.mxu0 0.0
    %819 = vmatpush1.msra.mxu0 0.0
    %820 = vmatprep.subr.mxu0 0.0
    %821 = vmatpush1.msra.mxu0 0.0
    %822 = vmatprep.subr.mxu0 0.0
    %823 = vmatpush1.msra.mxu0 0.0
    %824 = vmatprep.subr.mxu0 0.0
    %825 = vmatpush1.msra.mxu0 0.0
    %826 = vmatprep.subr.mxu0 0.0
    %827 = vmatpush1.msra.mxu0 0.0
    %828 = vmatprep.subr.mxu0 0.0
    %829 = vmatpush1.msra.mxu0 0.0
    %830 = vmatprep.subr.mxu0 0.0
    %831 = vmatpush1.msra.mxu0 0.0
    %832 = vmatprep.subr.mxu0 0.0
    %833 = vmatpush1.msra.mxu0 0.0
    %834 = vmatprep.subr.mxu0 0.0
    %835 = vmatpush1.msra.mxu0 0.0
    %836 = vmatprep.subr.mxu0 0.0
    %837 = vmatpush1.msra.mxu0 0.0
    %838 = vmatprep.subr.mxu0 0.0
    %839 = vmatpush1.msra.mxu0 0.0
    %840 = vmatprep.subr.mxu0 0.0
    %841 = vmatpush1.msra.mxu0 0.0
    %842 = vmatprep.mubr.f32.mxu0 0.0
    %843 = vmatmul.mubr.f32.gmra.mrb[0].mxu0 %v776
    %v844 = vpop.f32.mrb[0].mxu0
    %v845 = vadd.f32 0.0, %v844
    %v846 = vpop.f32.mrb[0].mxu0
    %847 = vdwg.mxu0
    %v849 = vsel %vm699, %v774, 0
    %851 = vmatprep.subr.mxu0 0.0
    %852 = vmatpush1.msra.mxu0 %v68
    %853 = vmatprep.subr.mxu0 0.0
    %854 = vmatpush1.msra.mxu0 %v69
    %855 = vmatprep.subr.mxu0 0.0
    %856 = vmatpush1.msra.mxu0 %v70
    %857 = vmatprep.subr.mxu0 0.0
    %858 = vmatpush1.msra.mxu0 %v71
    %859 = vmatprep.subr.mxu0 0.0
    %860 = vmatpush1.msra.mxu0 0.0
    %861 = vmatprep.subr.mxu0 0.0
    %862 = vmatpush1.msra.mxu0 0.0
    %863 = vmatprep.subr.mxu0 0.0
    %864 = vmatpush1.msra.mxu0 0.0
    %865 = vmatprep.subr.mxu0 0.0
    %866 = vmatpush1.msra.mxu0 0.0
    %867 = vmatprep.subr.mxu0 0.0
    %868 = vmatpush1.msra.mxu0 0.0
    %869 = vmatprep.subr.mxu0 0.0
    %870 = vmatpush1.msra.mxu0 0.0
    %871 = vmatprep.subr.mxu0 0.0
    %872 = vmatpush1.msra.mxu0 0.0
    %873 = vmatprep.subr.mxu0 0.0
    %874 = vmatpush1.msra.mxu0 0.0
    %875 = vmatprep.subr.mxu0 0.0
    %876 = vmatpush1.msra.mxu0 0.0
    %877 = vmatprep.subr.mxu0 0.0
    %878 = vmatpush1.msra.mxu0 0.0
    %879 = vmatprep.subr.mxu0 0.0
    %880 = vmatpush1.msra.mxu0 0.0
    %881 = vmatprep.subr.mxu0 0.0
    %882 = vmatpush1.msra.mxu0 0.0
    %883 = vmatprep.subr.mxu0 0.0
    %884 = vmatpush1.msra.mxu0 0.0
    %885 = vmatprep.subr.mxu0 0.0
    %886 = vmatpush1.msra.mxu0 0.0
    %887 = vmatprep.subr.mxu0 0.0
    %888 = vmatpush1.msra.mxu0 0.0
    %889 = vmatprep.subr.mxu0 0.0
    %890 = vmatpush1.msra.mxu0 0.0
    %891 = vmatprep.subr.mxu0 0.0
    %892 = vmatpush1.msra.mxu0 0.0
    %893 = vmatprep.subr.mxu0 0.0
    %894 = vmatpush1.msra.mxu0 0.0
    %895 = vmatprep.subr.mxu0 0.0
    %896 = vmatpush1.msra.mxu0 0.0
    %897 = vmatprep.subr.mxu0 0.0
    %898 = vmatpush1.msra.mxu0 0.0
    %899 = vmatprep.subr.mxu0 0.0
    %900 = vmatpush1.msra.mxu0 0.0
    %901 = vmatprep.subr.mxu0 0.0
    %902 = vmatpush1.msra.mxu0 0.0
    %903 = vmatprep.subr.mxu0 0.0
    %904 = vmatpush1.msra.mxu0 0.0
    %905 = vmatprep.subr.mxu0 0.0
    %906 = vmatpush1.msra.mxu0 0.0
    %907 = vmatprep.subr.mxu0 0.0
    %908 = vmatpush1.msra.mxu0 0.0
    %909 = vmatprep.subr.mxu0 0.0
    %910 = vmatpush1.msra.mxu0 0.0
    %911 = vmatprep.subr.mxu0 0.0
    %912 = vmatpush1.msra.mxu0 0.0
    %913 = vmatprep.subr.mxu0 0.0
    %914 = vmatpush1.msra.mxu0 0.0
    %915 = vmatprep.mubr.f32.mxu0 0.0
    %916 = vmatmul.mubr.f32.gmra.mrb[0].mxu0 %v849
    %v917 = vpop.f32.mrb[0].mxu0
    %v918 = vadd.f32 %v845, %v917
    %v919 = vpop.f32.mrb[0].mxu0
    %920 = vdwg.mxu0
    %v922 = vlaneseq
    %v923 = vshrl.u32 %v922, 7
    %v924 = vsub.s32 0, %v923
    %v925 = vrot.slane %v81, %v924
    %v927 = vadd.f32 %v918, %v925
    %v928 = vtanh.pop %v927
    %929 = vmatprep.subr.mxu0 0.0
    %930 = vmatpush1.msra.mxu0 %v72
    %931 = vmatprep.subr.mxu0 0.0
    %932 = vmatpush1.msra.mxu0 %v73
    %933 = vmatprep.subr.mxu0 0.0
    %934 = vmatpush1.msra.mxu0 %v74
    %935 = vmatprep.subr.mxu0 0.0
    %936 = vmatpush1.msra.mxu0 %v75
    %937 = vmatprep.subr.mxu0 0.0
    %938 = vmatpush1.msra.mxu0 0.0
    %939 = vmatprep.subr.mxu0 0.0
    %940 = vmatpush1.msra.mxu0 0.0
    %941 = vmatprep.subr.mxu0 0.0
    %942 = vmatpush1.msra.mxu0 0.0
    %943 = vmatprep.subr.mxu0 0.0
    %944 = vmatpush1.msra.mxu0 0.0
    %945 = vmatprep.subr.mxu0 0.0
    %946 = vmatpush1.msra.mxu0 0.0
    %947 = vmatprep.subr.mxu0 0.0
    %948 = vmatpush1.msra.mxu0 0.0
    %949 = vmatprep.subr.mxu0 0.0
    %950 = vmatpush1.msra.mxu0 0.0
    %951 = vmatprep.subr.mxu0 0.0
    %952 = vmatpush1.msra.mxu0 0.0
    %953 = vmatprep.subr.mxu0 0.0
    %954 = vmatpush1.msra.mxu0 0.0
    %955 = vmatprep.subr.mxu0 0.0
    %956 = vmatpush1.msra.mxu0 0.0
    %957 = vmatprep.subr.mxu0 0.0
    %958 = vmatpush1.msra.mxu0 0.0
    %959 = vmatprep.subr.mxu0 0.0
    %960 = vmatpush1.msra.mxu0 0.0
    %961 = vmatprep.subr.mxu0 0.0
    %962 = vmatpush1.msra.mxu0 0.0
    %963 = vmatprep.subr.mxu0 0.0
    %964 = vmatpush1.msra.mxu0 0.0
    %965 = vmatprep.subr.mxu0 0.0
    %966 = vmatpush1.msra.mxu0 0.0
    %967 = vmatprep.subr.mxu0 0.0
    %968 = vmatpush1.msra.mxu0 0.0
    %969 = vmatprep.subr.mxu0 0.0
    %970 = vmatpush1.msra.mxu0 0.0
    %971 = vmatprep.subr.mxu0 0.0
    %972 = vmatpush1.msra.mxu0 0.0
    %973 = vmatprep.subr.mxu0 0.0
    %974 = vmatpush1.msra.mxu0 0.0
    %975 = vmatprep.subr.mxu0 0.0
    %976 = vmatpush1.msra.mxu0 0.0
    %977 = vmatprep.subr.mxu0 0.0
    %978 = vmatpush1.msra.mxu0 0.0
    %979 = vmatprep.subr.mxu0 0.0
    %980 = vmatpush1.msra.mxu0 0.0
    %981 = vmatprep.subr.mxu0 0.0
    %982 = vmatpush1.msra.mxu0 0.0
    %983 = vmatprep.subr.mxu0 0.0
    %984 = vmatpush1.msra.mxu0 0.0
    %985 = vmatprep.subr.mxu0 0.0
    %986 = vmatpush1.msra.mxu0 0.0
    %987 = vmatprep.subr.mxu0 0.0
    %988 = vmatpush1.msra.mxu0 0.0
    %989 = vmatprep.subr.mxu0 0.0
    %990 = vmatpush1.msra.mxu0 0.0
    %991 = vmatprep.subr.mxu0 0.0
    %992 = vmatpush1.msra.mxu0 0.0
    %993 = vmatprep.mubr.f32.mxu0 0.0
    %994 = vmatmul.mubr.f32.gmra.mrb[0].mxu0 %v849
    %v995 = vpop.f32.mrb[0].mxu0
    %v996 = vadd.f32 0.0, %v995
    %v997 = vpop.f32.mrb[0].mxu0
    %998 = vdwg.mxu0
    %v999 = vadd.f32 %v246, %v996
    %v1000 = vtanh.pop %v999
    %v1002 = vsel %vm699, %v928, 0
    %1004 = vmatprep.subr.mxu0 0.0
    %1005 = vmatpush1.msra.mxu0 %v76
    %1006 = vmatprep.subr.mxu0 0.0
    %1007 = vmatpush1.msra.mxu0 %v77
    %1008 = vmatprep.subr.mxu0 0.0
    %1009 = vmatpush1.msra.mxu0 %v78
    %1010 = vmatprep.subr.mxu0 0.0
    %1011 = vmatpush1.msra.mxu0 %v79
    %1012 = vmatprep.subr.mxu0 0.0
    %1013 = vmatpush1.msra.mxu0 0.0
    %1014 = vmatprep.subr.mxu0 0.0
    %1015 = vmatpush1.msra.mxu0 0.0
    %1016 = vmatprep.subr.mxu0 0.0
    %1017 = vmatpush1.msra.mxu0 0.0
    %1018 = vmatprep.subr.mxu0 0.0
    %1019 = vmatpush1.msra.mxu0 0.0
    %1020 = vmatprep.subr.mxu0 0.0
    %1021 = vmatpush1.msra.mxu0 0.0
    %1022 = vmatprep.subr.mxu0 0.0
    %1023 = vmatpush1.msra.mxu0 0.0
    %1024 = vmatprep.subr.mxu0 0.0
    %1025 = vmatpush1.msra.mxu0 0.0
    %1026 = vmatprep.subr.mxu0 0.0
    %1027 = vmatpush1.msra.mxu0 0.0
    %1028 = vmatprep.subr.mxu0 0.0
    %1029 = vmatpush1.msra.mxu0 0.0
    %1030 = vmatprep.subr.mxu0 0.0
    %1031 = vmatpush1.msra.mxu0 0.0
    %1032 = vmatprep.subr.mxu0 0.0
    %1033 = vmatpush1.msra.mxu0 0.0
    %1034 = vmatprep.subr.mxu0 0.0
    %1035 = vmatpush1.msra.mxu0 0.0
    %1036 = vmatprep.subr.mxu0 0.0
    %1037 = vmatpush1.msra.mxu0 0.0
    %1038 = vmatprep.subr.mxu0 0.0
    %1039 = vmatpush1.msra.mxu0 0.0
    %1040 = vmatprep.subr.mxu0 0.0
    %1041 = vmatpush1.msra.mxu0 0.0
    %1042 = vmatprep.subr.mxu0 0.0
    %1043 = vmatpush1.msra.mxu0 0.0
    %1044 = vmatprep.subr.mxu0 0.0
    %1045 = vmatpush1.msra.mxu0 0.0
    %1046 = vmatprep.subr.mxu0 0.0
    %1047 = vmatpush1.msra.mxu0 0.0
    %1048 = vmatprep.subr.mxu0 0.0
    %1049 = vmatpush1.msra.mxu0 0.0
    %1050 = vmatprep.subr.mxu0 0.0
    %1051 = vmatpush1.msra.mxu0 0.0
    %1052 = vmatprep.subr.mxu0 0.0
    %1053 = vmatpush1.msra.mxu0 0.0
    %1054 = vmatprep.subr.mxu0 0.0
    %1055 = vmatpush1.msra.mxu0 0.0
    %1056 = vmatprep.subr.mxu0 0.0
    %1057 = vmatpush1.msra.mxu0 0.0
    %1058 = vmatprep.subr.mxu0 0.0
    %1059 = vmatpush1.msra.mxu0 0.0
    %1060 = vmatprep.subr.mxu0 0.0
    %1061 = vmatpush1.msra.mxu0 0.0
    %1062 = vmatprep.subr.mxu0 0.0
    %1063 = vmatpush1.msra.mxu0 0.0
    %1064 = vmatprep.subr.mxu0 0.0
    %1065 = vmatpush1.msra.mxu0 0.0
    %1066 = vmatprep.subr.mxu0 0.0
    %1067 = vmatpush1.msra.mxu0 0.0
    %1068 = vmatprep.mubr.f32.mxu0 0.0
    %1069 = vmatmul.mubr.f32.gmra.mrb[0].mxu0 %v1002
    %v1070 = vpop.f32.mrb[0].mxu0
    %v1071 = vadd.f32 0.0, %v1070
    %v1072 = vpop.f32.mrb[0].mxu0
    %1073 = vdwg.mxu0
    %v1075 = vsel %vm699, %v1000, 0
    %1077 = vmatprep.subr.mxu0 0.0
    %1078 = vmatpush1.msra.mxu0 %v68
    %1079 = vmatprep.subr.mxu0 0.0
    %1080 = vmatpush1.msra.mxu0 %v69
    %1081 = vmatprep.subr.mxu0 0.0
    %1082 = vmatpush1.msra.mxu0 %v70
    %1083 = vmatprep.subr.mxu0 0.0
    %1084 = vmatpush1.msra.mxu0 %v71
    %1085 = vmatprep.subr.mxu0 0.0
    %1086 = vmatpush1.msra.mxu0 0.0
    %1087 = vmatprep.subr.mxu0 0.0
    %1088 = vmatpush1.msra.mxu0 0.0
    %1089 = vmatprep.subr.mxu0 0.0
    %1090 = vmatpush1.msra.mxu0 0.0
    %1091 = vmatprep.subr.mxu0 0.0
    %1092 = vmatpush1.msra.mxu0 0.0
    %1093 = vmatprep.subr.mxu0 0.0
    %1094 = vmatpush1.msra.mxu0 0.0
    %1095 = vmatprep.subr.mxu0 0.0
    %1096 = vmatpush1.msra.mxu0 0.0
    %1097 = vmatprep.subr.mxu0 0.0
    %1098 = vmatpush1.msra.mxu0 0.0
    %1099 = vmatprep.subr.mxu0 0.0
    %1100 = vmatpush1.msra.mxu0 0.0
    %1101 = vmatprep.subr.mxu0 0.0
    %1102 = vmatpush1.msra.mxu0 0.0
    %1103 = vmatprep.subr.mxu0 0.0
    %1104 = vmatpush1.msra.mxu0 0.0
    %1105 = vmatprep.subr.mxu0 0.0
    %1106 = vmatpush1.msra.mxu0 0.0
    %1107 = vmatprep.subr.mxu0 0.0
    %1108 = vmatpush1.msra.mxu0 0.0
    %1109 = vmatprep.subr.mxu0 0.0
    %1110 = vmatpush1.msra.mxu0 0.0
    %1111 = vmatprep.subr.mxu0 0.0
    %1112 = vmatpush1.msra.mxu0 0.0
    %1113 = vmatprep.subr.mxu0 0.0
    %1114 = vmatpush1.msra.mxu0 0.0
    %1115 = vmatprep.subr.mxu0 0.0
    %1116 = vmatpush1.msra.mxu0 0.0
    %1117 = vmatprep.subr.mxu0 0.0
    %1118 = vmatpush1.msra.mxu0 0.0
    %1119 = vmatprep.subr.mxu0 0.0
    %1120 = vmatpush1.msra.mxu0 0.0
    %1121 = vmatprep.subr.mxu0 0.0
    %1122 = vmatpush1.msra.mxu0 0.0
    %1123 = vmatprep.subr.mxu0 0.0
    %1124 = vmatpush1.msra.mxu0 0.0
    %1125 = vmatprep.subr.mxu0 0.0
    %1126 = vmatpush1.msra.mxu0 0.0
    %1127 = vmatprep.subr.mxu0 0.0
    %1128 = vmatpush1.msra.mxu0 0.0
    %1129 = vmatprep.subr.mxu0 0.0
    %1130 = vmatpush1.msra.mxu0 0.0
    %1131 = vmatprep.subr.mxu0 0.0
    %1132 = vmatpush1.msra.mxu0 0.0
    %1133 = vmatprep.subr.mxu0 0.0
    %1134 = vmatpush1.msra.mxu0 0.0
    %1135 = vmatprep.subr.mxu0 0.0
    %1136 = vmatpush1.msra.mxu0 0.0
    %1137 = vmatprep.subr.mxu0 0.0
    %1138 = vmatpush1.msra.mxu0 0.0
    %1139 = vmatprep.subr.mxu0 0.0
    %1140 = vmatpush1.msra.mxu0 0.0
    %1141 = vmatprep.mubr.f32.mxu0 0.0
    %1142 = vmatmul.mubr.f32.gmra.mrb[0].mxu0 %v1075
    %v1143 = vpop.f32.mrb[0].mxu0
    %v1144 = vadd.f32 %v1071, %v1143
    %v1145 = vpop.f32.mrb[0].mxu0
    %1146 = vdwg.mxu0
    %v1147 = vadd.f32 %v1144, %v925
    %v1148 = vtanh.pop %v1147
    %1149 = vmatprep.subr.mxu0 0.0
    %1150 = vmatpush1.msra.mxu0 %v72
    %1151 = vmatprep.subr.mxu0 0.0
    %1152 = vmatpush1.msra.mxu0 %v73
    %1153 = vmatprep.subr.mxu0 0.0
    %1154 = vmatpush1.msra.mxu0 %v74
    %1155 = vmatprep.subr.mxu0 0.0
    %1156 = vmatpush1.msra.mxu0 %v75
    %1157 = vmatprep.subr.mxu0 0.0
    %1158 = vmatpush1.msra.mxu0 0.0
    %1159 = vmatprep.subr.mxu0 0.0
    %1160 = vmatpush1.msra.mxu0 0.0
    %1161 = vmatprep.subr.mxu0 0.0
    %1162 = vmatpush1.msra.mxu0 0.0
    %1163 = vmatprep.subr.mxu0 0.0
    %1164 = vmatpush1.msra.mxu0 0.0
    %1165 = vmatprep.subr.mxu0 0.0
    %1166 = vmatpush1.msra.mxu0 0.0
    %1167 = vmatprep.subr.mxu0 0.0
    %1168 = vmatpush1.msra.mxu0 0.0
    %1169 = vmatprep.subr.mxu0 0.0
    %1170 = vmatpush1.msra.mxu0 0.0
    %1171 = vmatprep.subr.mxu0 0.0
    %1172 = vmatpush1.msra.mxu0 0.0
    %1173 = vmatprep.subr.mxu0 0.0
    %1174 = vmatpush1.msra.mxu0 0.0
    %1175 = vmatprep.subr.mxu0 0.0
    %1176 = vmatpush1.msra.mxu0 0.0
    %1177 = vmatprep.subr.mxu0 0.0
    %1178 = vmatpush1.msra.mxu0 0.0
    %1179 = vmatprep.subr.mxu0 0.0
    %1180 = vmatpush1.msra.mxu0 0.0
    %1181 = vmatprep.subr.mxu0 0.0
    %1182 = vmatpush1.msra.mxu0 0.0
    %1183 = vmatprep.subr.mxu0 0.0
    %1184 = vmatpush1.msra.mxu0 0.0
    %1185 = vmatprep.subr.mxu0 0.0
    %1186 = vmatpush1.msra.mxu0 0.0
    %1187 = vmatprep.subr.mxu0 0.0
    %1188 = vmatpush1.msra.mxu0 0.0
    %1189 = vmatprep.subr.mxu0 0.0
    %1190 = vmatpush1.msra.mxu0 0.0
    %1191 = vmatprep.subr.mxu0 0.0
    %1192 = vmatpush1.msra.mxu0 0.0
    %1193 = vmatprep.subr.mxu0 0.0
    %1194 = vmatpush1.msra.mxu0 0.0
    %1195 = vmatprep.subr.mxu0 0.0
    %1196 = vmatpush1.msra.mxu0 0.0
    %1197 = vmatprep.subr.mxu0 0.0
    %1198 = vmatpush1.msra.mxu0 0.0
    %1199 = vmatprep.subr.mxu0 0.0
    %1200 = vmatpush1.msra.mxu0 0.0
    %1201 = vmatprep.subr.mxu0 0.0
    %1202 = vmatpush1.msra.mxu0 0.0
    %1203 = vmatprep.subr.mxu0 0.0
    %1204 = vmatpush1.msra.mxu0 0.0
    %1205 = vmatprep.subr.mxu0 0.0
    %1206 = vmatpush1.msra.mxu0 0.0
    %1207 = vmatprep.subr.mxu0 0.0
    %1208 = vmatpush1.msra.mxu0 0.0
    %1209 = vmatprep.subr.mxu0 0.0
    %1210 = vmatpush1.msra.mxu0 0.0
    %1211 = vmatprep.subr.mxu0 0.0
    %1212 = vmatpush1.msra.mxu0 0.0
    %1213 = vmatprep.mubr.f32.mxu0 0.0
    %1214 = vmatmul.mubr.f32.gmra.mrb[0].mxu0 %v1075
    %v1215 = vpop.f32.mrb[0].mxu0
    %v1216 = vadd.f32 0.0, %v1215
    %v1217 = vpop.f32.mrb[0].mxu0
    %1218 = vdwg.mxu0
    %v1219 = vadd.f32 %v321, %v1216
    %v1220 = vtanh.pop %v1219
    %v1222 = vsel %vm699, %v1148, 0
    %1224 = vmatprep.subr.mxu0 0.0
    %1225 = vmatpush1.msra.mxu0 %v76
    %1226 = vmatprep.subr.mxu0 0.0
    %1227 = vmatpush1.msra.mxu0 %v77
    %1228 = vmatprep.subr.mxu0 0.0
    %1229 = vmatpush1.msra.mxu0 %v78
    %1230 = vmatprep.subr.mxu0 0.0
    %1231 = vmatpush1.msra.mxu0 %v79
    %1232 = vmatprep.subr.mxu0 0.0
    %1233 = vmatpush1.msra.mxu0 0.0
    %1234 = vmatprep.subr.mxu0 0.0
    %1235 = vmatpush1.msra.mxu0 0.0
    %1236 = vmatprep.subr.mxu0 0.0
    %1237 = vmatpush1.msra.mxu0 0.0
    %1238 = vmatprep.subr.mxu0 0.0
    %1239 = vmatpush1.msra.mxu0 0.0
    %1240 = vmatprep.subr.mxu0 0.0
    %1241 = vmatpush1.msra.mxu0 0.0
    %1242 = vmatprep.subr.mxu0 0.0
    %1243 = vmatpush1.msra.mxu0 0.0
    %1244 = vmatprep.subr.mxu0 0.0
    %1245 = vmatpush1.msra.mxu0 0.0
    %1246 = vmatprep.subr.mxu0 0.0
    %1247 = vmatpush1.msra.mxu0 0.0
    %1248 = vmatprep.subr.mxu0 0.0
    %1249 = vmatpush1.msra.mxu0 0.0
    %1250 = vmatprep.subr.mxu0 0.0
    %1251 = vmatpush1.msra.mxu0 0.0
    %1252 = vmatprep.subr.mxu0 0.0
    %1253 = vmatpush1.msra.mxu0 0.0
    %1254 = vmatprep.subr.mxu0 0.0
    %1255 = vmatpush1.msra.mxu0 0.0
    %1256 = vmatprep.subr.mxu0 0.0
    %1257 = vmatpush1.msra.mxu0 0.0
    %1258 = vmatprep.subr.mxu0 0.0
    %1259 = vmatpush1.msra.mxu0 0.0
    %1260 = vmatprep.subr.mxu0 0.0
    %1261 = vmatpush1.msra.mxu0 0.0
    %1262 = vmatprep.subr.mxu0 0.0
    %1263 = vmatpush1.msra.mxu0 0.0
    %1264 = vmatprep.subr.mxu0 0.0
    %1265 = vmatpush1.msra.mxu0 0.0
    %1266 = vmatprep.subr.mxu0 0.0
    %1267 = vmatpush1.msra.mxu0 0.0
    %1268 = vmatprep.subr.mxu0 0.0
    %1269 = vmatpush1.msra.mxu0 0.0
    %1270 = vmatprep.subr.mxu0 0.0
    %1271 = vmatpush1.msra.mxu0 0.0
    %1272 = vmatprep.subr.mxu0 0.0
    %1273 = vmatpush1.msra.mxu0 0.0
    %1274 = vmatprep.subr.mxu0 0.0
    %1275 = vmatpush1.msra.mxu0 0.0
    %1276 = vmatprep.subr.mxu0 0.0
    %1277 = vmatpush1.msra.mxu0 0.0
    %1278 = vmatprep.subr.mxu0 0.0
    %1279 = vmatpush1.msra.mxu0 0.0
    %1280 = vmatprep.subr.mxu0 0.0
    %1281 = vmatpush1.msra.mxu0 0.0
    %1282 = vmatprep.subr.mxu0 0.0
    %1283 = vmatpush1.msra.mxu0 0.0
    %1284 = vmatprep.subr.mxu0 0.0
    %1285 = vmatpush1.msra.mxu0 0.0
    %1286 = vmatprep.subr.mxu0 0.0
    %1287 = vmatpush1.msra.mxu0 0.0
    %1288 = vmatprep.mubr.f32.mxu0 0.0
    %1289 = vmatmul.mubr.f32.gmra.mrb[0].mxu0 %v1222
    %v1290 = vpop.f32.mrb[0].mxu0
    %v1291 = vadd.f32 0.0, %v1290
    %v1292 = vpop.f32.mrb[0].mxu0
    %1293 = vdwg.mxu0
    %v1295 = vsel %vm699, %v1220, 0
    %1297 = vmatprep.subr.mxu0 0.0
    %1298 = vmatpush1.msra.mxu0 %v68
    %1299 = vmatprep.subr.mxu0 0.0
    %1300 = vmatpush1.msra.mxu0 %v69
    %1301 = vmatprep.subr.mxu0 0.0
    %1302 = vmatpush1.msra.mxu0 %v70
    %1303 = vmatprep.subr.mxu0 0.0
    %1304 = vmatpush1.msra.mxu0 %v71
    %1305 = vmatprep.subr.mxu0 0.0
    %1306 = vmatpush1.msra.mxu0 0.0
    %1307 = vmatprep.subr.mxu0 0.0
    %1308 = vmatpush1.msra.mxu0 0.0
    %1309 = vmatprep.subr.mxu0 0.0
    %1310 = vmatpush1.msra.mxu0 0.0
    %1311 = vmatprep.subr.mxu0 0.0
    %1312 = vmatpush1.msra.mxu0 0.0
    %1313 = vmatprep.subr.mxu0 0.0
    %1314 = vmatpush1.msra.mxu0 0.0
    %1315 = vmatprep.subr.mxu0 0.0
    %1316 = vmatpush1.msra.mxu0 0.0
    %1317 = vmatprep.subr.mxu0 0.0
    %1318 = vmatpush1.msra.mxu0 0.0
    %1319 = vmatprep.subr.mxu0 0.0
    %1320 = vmatpush1.msra.mxu0 0.0
    %1321 = vmatprep.subr.mxu0 0.0
    %1322 = vmatpush1.msra.mxu0 0.0
    %1323 = vmatprep.subr.mxu0 0.0
    %1324 = vmatpush1.msra.mxu0 0.0
    %1325 = vmatprep.subr.mxu0 0.0
    %1326 = vmatpush1.msra.mxu0 0.0
    %1327 = vmatprep.subr.mxu0 0.0
    %1328 = vmatpush1.msra.mxu0 0.0
    %1329 = vmatprep.subr.mxu0 0.0
    %1330 = vmatpush1.msra.mxu0 0.0
    %1331 = vmatprep.subr.mxu0 0.0
    %1332 = vmatpush1.msra.mxu0 0.0
    %1333 = vmatprep.subr.mxu0 0.0
    %1334 = vmatpush1.msra.mxu0 0.0
    %1335 = vmatprep.subr.mxu0 0.0
    %1336 = vmatpush1.msra.mxu0 0.0
    %1337 = vmatprep.subr.mxu0 0.0
    %1338 = vmatpush1.msra.mxu0 0.0
    %1339 = vmatprep.subr.mxu0 0.0
    %1340 = vmatpush1.msra.mxu0 0.0
    %1341 = vmatprep.subr.mxu0 0.0
    %1342 = vmatpush1.msra.mxu0 0.0
    %1343 = vmatprep.subr.mxu0 0.0
    %1344 = vmatpush1.msra.mxu0 0.0
    %1345 = vmatprep.subr.mxu0 0.0
    %1346 = vmatpush1.msra.mxu0 0.0
    %1347 = vmatprep.subr.mxu0 0.0
    %1348 = vmatpush1.msra.mxu0 0.0
    %1349 = vmatprep.subr.mxu0 0.0
    %1350 = vmatpush1.msra.mxu0 0.0
    %1351 = vmatprep.subr.mxu0 0.0
    %1352 = vmatpush1.msra.mxu0 0.0
    %1353 = vmatprep.subr.mxu0 0.0
    %1354 = vmatpush1.msra.mxu0 0.0
    %1355 = vmatprep.subr.mxu0 0.0
    %1356 = vmatpush1.msra.mxu0 0.0
    %1357 = vmatprep.subr.mxu0 0.0
    %1358 = vmatpush1.msra.mxu0 0.0
    %1359 = vmatprep.subr.mxu0 0.0
    %1360 = vmatpush1.msra.mxu0 0.0
    %1361 = vmatprep.mubr.f32.mxu0 0.0
    %1362 = vmatmul.mubr.f32.gmra.mrb[0].mxu0 %v1295
    %v1363 = vpop.f32.mrb[0].mxu0
    %v1364 = vadd.f32 %v1291, %v1363
    %v1365 = vpop.f32.mrb[0].mxu0
    %1366 = vdwg.mxu0
    %v1367 = vadd.f32 %v1364, %v925
    %v1368 = vtanh.pop %v1367
    %1369 = vmatprep.subr.mxu0 0.0
    %1370 = vmatpush1.msra.mxu0 %v72
    %1371 = vmatprep.subr.mxu0 0.0
    %1372 = vmatpush1.msra.mxu0 %v73
    %1373 = vmatprep.subr.mxu0 0.0
    %1374 = vmatpush1.msra.mxu0 %v74
    %1375 = vmatprep.subr.mxu0 0.0
    %1376 = vmatpush1.msra.mxu0 %v75
    %1377 = vmatprep.subr.mxu0 0.0
    %1378 = vmatpush1.msra.mxu0 0.0
    %1379 = vmatprep.subr.mxu0 0.0
    %1380 = vmatpush1.msra.mxu0 0.0
    %1381 = vmatprep.subr.mxu0 0.0
    %1382 = vmatpush1.msra.mxu0 0.0
    %1383 = vmatprep.subr.mxu0 0.0
    %1384 = vmatpush1.msra.mxu0 0.0
    %1385 = vmatprep.subr.mxu0 0.0
    %1386 = vmatpush1.msra.mxu0 0.0
    %1387 = vmatprep.subr.mxu0 0.0
    %1388 = vmatpush1.msra.mxu0 0.0
    %1389 = vmatprep.subr.mxu0 0.0
    %1390 = vmatpush1.msra.mxu0 0.0
    %1391 = vmatprep.subr.mxu0 0.0
    %1392 = vmatpush1.msra.mxu0 0.0
    %1393 = vmatprep.subr.mxu0 0.0
    %1394 = vmatpush1.msra.mxu0 0.0
    %1395 = vmatprep.subr.mxu0 0.0
    %1396 = vmatpush1.msra.mxu0 0.0
    %1397 = vmatprep.subr.mxu0 0.0
    %1398 = vmatpush1.msra.mxu0 0.0
    %1399 = vmatprep.subr.mxu0 0.0
    %1400 = vmatpush1.msra.mxu0 0.0
    %1401 = vmatprep.subr.mxu0 0.0
    %1402 = vmatpush1.msra.mxu0 0.0
    %1403 = vmatprep.subr.mxu0 0.0
    %1404 = vmatpush1.msra.mxu0 0.0
    %1405 = vmatprep.subr.mxu0 0.0
    %1406 = vmatpush1.msra.mxu0 0.0
    %1407 = vmatprep.subr.mxu0 0.0
    %1408 = vmatpush1.msra.mxu0 0.0
    %1409 = vmatprep.subr.mxu0 0.0
    %1410 = vmatpush1.msra.mxu0 0.0
    %1411 = vmatprep.subr.mxu0 0.0
    %1412 = vmatpush1.msra.mxu0 0.0
    %1413 = vmatprep.subr.mxu0 0.0
    %1414 = vmatpush1.msra.mxu0 0.0
    %1415 = vmatprep.subr.mxu0 0.0
    %1416 = vmatpush1.msra.mxu0 0.0
    %1417 = vmatprep.subr.mxu0 0.0
    %1418 = vmatpush1.msra.mxu0 0.0
    %1419 = vmatprep.subr.mxu0 0.0
    %1420 = vmatpush1.msra.mxu0 0.0
    %1421 = vmatprep.subr.mxu0 0.0
    %1422 = vmatpush1.msra.mxu0 0.0
    %1423 = vmatprep.subr.mxu0 0.0
    %1424 = vmatpush1.msra.mxu0 0.0
    %1425 = vmatprep.subr.mxu0 0.0
    %1426 = vmatpush1.msra.mxu0 0.0
    %1427 = vmatprep.subr.mxu0 0.0
    %1428 = vmatpush1.msra.mxu0 0.0
    %1429 = vmatprep.subr.mxu0 0.0
    %1430 = vmatpush1.msra.mxu0 0.0
    %1431 = vmatprep.subr.mxu0 0.0
    %1432 = vmatpush1.msra.mxu0 0.0
    %1433 = vmatprep.mubr.f32.mxu0 0.0
    %1434 = vmatmul.mubr.f32.gmra.mrb[0].mxu0 %v1295
    %v1435 = vpop.f32.mrb[0].mxu0
    %v1436 = vadd.f32 0.0, %v1435
    %v1437 = vpop.f32.mrb[0].mxu0
    %1438 = vdwg.mxu0
    %v1439 = vadd.f32 %v396, %v1436
    %v1440 = vtanh.pop %v1439
    %v1442 = vsel %vm699, %v1368, 0
    %1444 = vmatprep.subr.mxu0 0.0
    %1445 = vmatpush1.msra.mxu0 %v76
    %1446 = vmatprep.subr.mxu0 0.0
    %1447 = vmatpush1.msra.mxu0 %v77
    %1448 = vmatprep.subr.mxu0 0.0
    %1449 = vmatpush1.msra.mxu0 %v78
    %1450 = vmatprep.subr.mxu0 0.0
    %1451 = vmatpush1.msra.mxu0 %v79
    %1452 = vmatprep.subr.mxu0 0.0
    %1453 = vmatpush1.msra.mxu0 0.0
    %1454 = vmatprep.subr.mxu0 0.0
    %1455 = vmatpush1.msra.mxu0 0.0
    %1456 = vmatprep.subr.mxu0 0.0
    %1457 = vmatpush1.msra.mxu0 0.0
    %1458 = vmatprep.subr.mxu0 0.0
    %1459 = vmatpush1.msra.mxu0 0.0
    %1460 = vmatprep.subr.mxu0 0.0
    %1461 = vmatpush1.msra.mxu0 0.0
    %1462 = vmatprep.subr.mxu0 0.0
    %1463 = vmatpush1.msra.mxu0 0.0
    %1464 = vmatprep.subr.mxu0 0.0
    %1465 = vmatpush1.msra.mxu0 0.0
    %1466 = vmatprep.subr.mxu0 0.0
    %1467 = vmatpush1.msra.mxu0 0.0
    %1468 = vmatprep.subr.mxu0 0.0
    %1469 = vmatpush1.msra.mxu0 0.0
    %1470 = vmatprep.subr.mxu0 0.0
    %1471 = vmatpush1.msra.mxu0 0.0
    %1472 = vmatprep.subr.mxu0 0.0
    %1473 = vmatpush1.msra.mxu0 0.0
    %1474 = vmatprep.subr.mxu0 0.0
    %1475 = vmatpush1.msra.mxu0 0.0
    %1476 = vmatprep.subr.mxu0 0.0
    %1477 = vmatpush1.msra.mxu0 0.0
    %1478 = vmatprep.subr.mxu0 0.0
    %1479 = vmatpush1.msra.mxu0 0.0
    %1480 = vmatprep.subr.mxu0 0.0
    %1481 = vmatpush1.msra.mxu0 0.0
    %1482 = vmatprep.subr.mxu0 0.0
    %1483 = vmatpush1.msra.mxu0 0.0
    %1484 = vmatprep.subr.mxu0 0.0
    %1485 = vmatpush1.msra.mxu0 0.0
    %1486 = vmatprep.subr.mxu0 0.0
    %1487 = vmatpush1.msra.mxu0 0.0
    %1488 = vmatprep.subr.mxu0 0.0
    %1489 = vmatpush1.msra.mxu0 0.0
    %1490 = vmatprep.subr.mxu0 0.0
    %1491 = vmatpush1.msra.mxu0 0.0
    %1492 = vmatprep.subr.mxu0 0.0
    %1493 = vmatpush1.msra.mxu0 0.0
    %1494 = vmatprep.subr.mxu0 0.0
    %1495 = vmatpush1.msra.mxu0 0.0
    %1496 = vmatprep.subr.mxu0 0.0
    %1497 = vmatpush1.msra.mxu0 0.0
    %1498 = vmatprep.subr.mxu0 0.0
    %1499 = vmatpush1.msra.mxu0 0.0
    %1500 = vmatprep.subr.mxu0 0.0
    %1501 = vmatpush1.msra.mxu0 0.0
    %1502 = vmatprep.subr.mxu0 0.0
    %1503 = vmatpush1.msra.mxu0 0.0
    %1504 = vmatprep.subr.mxu0 0.0
    %1505 = vmatpush1.msra.mxu0 0.0
    %1506 = vmatprep.subr.mxu0 0.0
    %1507 = vmatpush1.msra.mxu0 0.0
    %1508 = vmatprep.mubr.f32.mxu0 0.0
    %1509 = vmatmul.mubr.f32.gmra.mrb[0].mxu0 %v1442
    %v1510 = vpop.f32.mrb[0].mxu0
    %v1511 = vadd.f32 0.0, %v1510
    %v1512 = vpop.f32.mrb[0].mxu0
    %1513 = vdwg.mxu0
    %v1515 = vsel %vm699, %v1440, 0
    %1517 = vmatprep.subr.mxu0 0.0
    %1518 = vmatpush1.msra.mxu0 %v68
    %1519 = vmatprep.subr.mxu0 0.0
    %1520 = vmatpush1.msra.mxu0 %v69
    %1521 = vmatprep.subr.mxu0 0.0
    %1522 = vmatpush1.msra.mxu0 %v70
    %1523 = vmatprep.subr.mxu0 0.0
    %1524 = vmatpush1.msra.mxu0 %v71
    %1525 = vmatprep.subr.mxu0 0.0
    %1526 = vmatpush1.msra.mxu0 0.0
    %1527 = vmatprep.subr.mxu0 0.0
    %1528 = vmatpush1.msra.mxu0 0.0
    %1529 = vmatprep.subr.mxu0 0.0
    %1530 = vmatpush1.msra.mxu0 0.0
    %1531 = vmatprep.subr.mxu0 0.0
    %1532 = vmatpush1.msra.mxu0 0.0
    %1533 = vmatprep.subr.mxu0 0.0
    %1534 = vmatpush1.msra.mxu0 0.0
    %1535 = vmatprep.subr.mxu0 0.0
    %1536 = vmatpush1.msra.mxu0 0.0
    %1537 = vmatprep.subr.mxu0 0.0
    %1538 = vmatpush1.msra.mxu0 0.0
    %1539 = vmatprep.subr.mxu0 0.0
    %1540 = vmatpush1.msra.mxu0 0.0
    %1541 = vmatprep.subr.mxu0 0.0
    %1542 = vmatpush1.msra.mxu0 0.0
    %1543 = vmatprep.subr.mxu0 0.0
    %1544 = vmatpush1.msra.mxu0 0.0
    %1545 = vmatprep.subr.mxu0 0.0
    %1546 = vmatpush1.msra.mxu0 0.0
    %1547 = vmatprep.subr.mxu0 0.0
    %1548 = vmatpush1.msra.mxu0 0.0
    %1549 = vmatprep.subr.mxu0 0.0
    %1550 = vmatpush1.msra.mxu0 0.0
    %1551 = vmatprep.subr.mxu0 0.0
    %1552 = vmatpush1.msra.mxu0 0.0
    %1553 = vmatprep.subr.mxu0 0.0
    %1554 = vmatpush1.msra.mxu0 0.0
    %1555 = vmatprep.subr.mxu0 0.0
    %1556 = vmatpush1.msra.mxu0 0.0
    %1557 = vmatprep.subr.mxu0 0.0
    %1558 = vmatpush1.msra.mxu0 0.0
    %1559 = vmatprep.subr.mxu0 0.0
    %1560 = vmatpush1.msra.mxu0 0.0
    %1561 = vmatprep.subr.mxu0 0.0
    %1562 = vmatpush1.msra.mxu0 0.0
    %1563 = vmatprep.subr.mxu0 0.0
    %1564 = vmatpush1.msra.mxu0 0.0
    %1565 = vmatprep.subr.mxu0 0.0
    %1566 = vmatpush1.msra.mxu0 0.0
    %1567 = vmatprep.subr.mxu0 0.0
    %1568 = vmatpush1.msra.mxu0 0.0
    %1569 = vmatprep.subr.mxu0 0.0
    %1570 = vmatpush1.msra.mxu0 0.0
    %1571 = vmatprep.subr.mxu0 0.0
    %1572 = vmatpush1.msra.mxu0 0.0
    %1573 = vmatprep.subr.mxu0 0.0
    %1574 = vmatpush1.msra.mxu0 0.0
    %1575 = vmatprep.subr.mxu0 0.0
    %1576 = vmatpush1.msra.mxu0 0.0
    %1577 = vmatprep.subr.mxu0 0.0
    %1578 = vmatpush1.msra.mxu0 0.0
    %1579 = vmatprep.subr.mxu0 0.0
    %1580 = vmatpush1.msra.mxu0 0.0
    %1581 = vmatprep.mubr.f32.mxu0 0.0
    %1582 = vmatmul.mubr.f32.gmra.mrb[0].mxu0 %v1515
    %v1583 = vpop.f32.mrb[0].mxu0
    %v1584 = vadd.f32 %v1511, %v1583
    %v1585 = vpop.f32.mrb[0].mxu0
    %1586 = vdwg.mxu0
    %v1587 = vadd.f32 %v1584, %v925
    %v1588 = vtanh.pop %v1587
    %1589 = vmatprep.subr.mxu0 0.0
    %1590 = vmatpush1.msra.mxu0 %v72
    %1591 = vmatprep.subr.mxu0 0.0
    %1592 = vmatpush1.msra.mxu0 %v73
    %1593 = vmatprep.subr.mxu0 0.0
    %1594 = vmatpush1.msra.mxu0 %v74
    %1595 = vmatprep.subr.mxu0 0.0
    %1596 = vmatpush1.msra.mxu0 %v75
    %1597 = vmatprep.subr.mxu0 0.0
    %1598 = vmatpush1.msra.mxu0 0.0
    %1599 = vmatprep.subr.mxu0 0.0
    %1600 = vmatpush1.msra.mxu0 0.0
    %1601 = vmatprep.subr.mxu0 0.0
    %1602 = vmatpush1.msra.mxu0 0.0
    %1603 = vmatprep.subr.mxu0 0.0
    %1604 = vmatpush1.msra.mxu0 0.0
    %1605 = vmatprep.subr.mxu0 0.0
    %1606 = vmatpush1.msra.mxu0 0.0
    %1607 = vmatprep.subr.mxu0 0.0
    %1608 = vmatpush1.msra.mxu0 0.0
    %1609 = vmatprep.subr.mxu0 0.0
    %1610 = vmatpush1.msra.mxu0 0.0
    %1611 = vmatprep.subr.mxu0 0.0
    %1612 = vmatpush1.msra.mxu0 0.0
    %1613 = vmatprep.subr.mxu0 0.0
    %1614 = vmatpush1.msra.mxu0 0.0
    %1615 = vmatprep.subr.mxu0 0.0
    %1616 = vmatpush1.msra.mxu0 0.0
    %1617 = vmatprep.subr.mxu0 0.0
    %1618 = vmatpush1.msra.mxu0 0.0
    %1619 = vmatprep.subr.mxu0 0.0
    %1620 = vmatpush1.msra.mxu0 0.0
    %1621 = vmatprep.subr.mxu0 0.0
    %1622 = vmatpush1.msra.mxu0 0.0
    %1623 = vmatprep.subr.mxu0 0.0
    %1624 = vmatpush1.msra.mxu0 0.0
    %1625 = vmatprep.subr.mxu0 0.0
    %1626 = vmatpush1.msra.mxu0 0.0
    %1627 = vmatprep.subr.mxu0 0.0
    %1628 = vmatpush1.msra.mxu0 0.0
    %1629 = vmatprep.subr.mxu0 0.0
    %1630 = vmatpush1.msra.mxu0 0.0
    %1631 = vmatprep.subr.mxu0 0.0
    %1632 = vmatpush1.msra.mxu0 0.0
    %1633 = vmatprep.subr.mxu0 0.0
    %1634 = vmatpush1.msra.mxu0 0.0
    %1635 = vmatprep.subr.mxu0 0.0
    %1636 = vmatpush1.msra.mxu0 0.0
    %1637 = vmatprep.subr.mxu0 0.0
    %1638 = vmatpush1.msra.mxu0 0.0
    %1639 = vmatprep.subr.mxu0 0.0
    %1640 = vmatpush1.msra.mxu0 0.0
    %1641 = vmatprep.subr.mxu0 0.0
    %1642 = vmatpush1.msra.mxu0 0.0
    %1643 = vmatprep.subr.mxu0 0.0
    %1644 = vmatpush1.msra.mxu0 0.0
    %1645 = vmatprep.subr.mxu0 0.0
    %1646 = vmatpush1.msra.mxu0 0.0
    %1647 = vmatprep.subr.mxu0 0.0
    %1648 = vmatpush1.msra.mxu0 0.0
    %1649 = vmatprep.subr.mxu0 0.0
    %1650 = vmatpush1.msra.mxu0 0.0
    %1651 = vmatprep.subr.mxu0 0.0
    %1652 = vmatpush1.msra.mxu0 0.0
    %1653 = vmatprep.mubr.f32.mxu0 0.0
    %1654 = vmatmul.mubr.f32.gmra.mrb[0].mxu0 %v1515
    %v1655 = vpop.f32.mrb[0].mxu0
    %v1656 = vadd.f32 0.0, %v1655
    %v1657 = vpop.f32.mrb[0].mxu0
    %1658 = vdwg.mxu0
    %v1659 = vadd.f32 %v471, %v1656
    %v1660 = vtanh.pop %v1659
    %v1662 = vsel %vm699, %v1588, 0
    %1664 = vmatprep.subr.mxu0 0.0
    %1665 = vmatpush1.msra.mxu0 %v76
    %1666 = vmatprep.subr.mxu0 0.0
    %1667 = vmatpush1.msra.mxu0 %v77
    %1668 = vmatprep.subr.mxu0 0.0
    %1669 = vmatpush1.msra.mxu0 %v78
    %1670 = vmatprep.subr.mxu0 0.0
    %1671 = vmatpush1.msra.mxu0 %v79
    %1672 = vmatprep.subr.mxu0 0.0
    %1673 = vmatpush1.msra.mxu0 0.0
    %1674 = vmatprep.subr.mxu0 0.0
    %1675 = vmatpush1.msra.mxu0 0.0
    %1676 = vmatprep.subr.mxu0 0.0
    %1677 = vmatpush1.msra.mxu0 0.0
    %1678 = vmatprep.subr.mxu0 0.0
    %1679 = vmatpush1.msra.mxu0 0.0
    %1680 = vmatprep.subr.mxu0 0.0
    %1681 = vmatpush1.msra.mxu0 0.0
    %1682 = vmatprep.subr.mxu0 0.0
    %1683 = vmatpush1.msra.mxu0 0.0
    %1684 = vmatprep.subr.mxu0 0.0
    %1685 = vmatpush1.msra.mxu0 0.0
    %1686 = vmatprep.subr.mxu0 0.0
    %1687 = vmatpush1.msra.mxu0 0.0
    %1688 = vmatprep.subr.mxu0 0.0
    %1689 = vmatpush1.msra.mxu0 0.0
    %1690 = vmatprep.subr.mxu0 0.0
    %1691 = vmatpush1.msra.mxu0 0.0
    %1692 = vmatprep.subr.mxu0 0.0
    %1693 = vmatpush1.msra.mxu0 0.0
    %1694 = vmatprep.subr.mxu0 0.0
    %1695 = vmatpush1.msra.mxu0 0.0
    %1696 = vmatprep.subr.mxu0 0.0
    %1697 = vmatpush1.msra.mxu0 0.0
    %1698 = vmatprep.subr.mxu0 0.0
    %1699 = vmatpush1.msra.mxu0 0.0
    %1700 = vmatprep.subr.mxu0 0.0
    %1701 = vmatpush1.msra.mxu0 0.0
    %1702 = vmatprep.subr.mxu0 0.0
    %1703 = vmatpush1.msra.mxu0 0.0
    %1704 = vmatprep.subr.mxu0 0.0
    %1705 = vmatpush1.msra.mxu0 0.0
    %1706 = vmatprep.subr.mxu0 0.0
    %1707 = vmatpush1.msra.mxu0 0.0
    %1708 = vmatprep.subr.mxu0 0.0
    %1709 = vmatpush1.msra.mxu0 0.0
    %1710 = vmatprep.subr.mxu0 0.0
    %1711 = vmatpush1.msra.mxu0 0.0
    %1712 = vmatprep.subr.mxu0 0.0
    %1713 = vmatpush1.msra.mxu0 0.0
    %1714 = vmatprep.subr.mxu0 0.0
    %1715 = vmatpush1.msra.mxu0 0.0
    %1716 = vmatprep.subr.mxu0 0.0
    %1717 = vmatpush1.msra.mxu0 0.0
    %1718 = vmatprep.subr.mxu0 0.0
    %1719 = vmatpush1.msra.mxu0 0.0
    %1720 = vmatprep.subr.mxu0 0.0
    %1721 = vmatpush1.msra.mxu0 0.0
    %1722 = vmatprep.subr.mxu0 0.0
    %1723 = vmatpush1.msra.mxu0 0.0
    %1724 = vmatprep.subr.mxu0 0.0
    %1725 = vmatpush1.msra.mxu0 0.0
    %1726 = vmatprep.subr.mxu0 0.0
    %1727 = vmatpush1.msra.mxu0 0.0
    %1728 = vmatprep.mubr.f32.mxu0 0.0
    %1729 = vmatmul.mubr.f32.gmra.mrb[0].mxu0 %v1662
    %v1730 = vpop.f32.mrb[0].mxu0
    %v1731 = vadd.f32 0.0, %v1730
    %v1732 = vpop.f32.mrb[0].mxu0
    %1733 = vdwg.mxu0
    %v1735 = vsel %vm699, %v1660, 0
    %1737 = vmatprep.subr.mxu0 0.0
    %1738 = vmatpush1.msra.mxu0 %v68
    %1739 = vmatprep.subr.mxu0 0.0
    %1740 = vmatpush1.msra.mxu0 %v69
    %1741 = vmatprep.subr.mxu0 0.0
    %1742 = vmatpush1.msra.mxu0 %v70
    %1743 = vmatprep.subr.mxu0 0.0
    %1744 = vmatpush1.msra.mxu0 %v71
    %1745 = vmatprep.subr.mxu0 0.0
    %1746 = vmatpush1.msra.mxu0 0.0
    %1747 = vmatprep.subr.mxu0 0.0
    %1748 = vmatpush1.msra.mxu0 0.0
    %1749 = vmatprep.subr.mxu0 0.0
    %1750 = vmatpush1.msra.mxu0 0.0
    %1751 = vmatprep.subr.mxu0 0.0
    %1752 = vmatpush1.msra.mxu0 0.0
    %1753 = vmatprep.subr.mxu0 0.0
    %1754 = vmatpush1.msra.mxu0 0.0
    %1755 = vmatprep.subr.mxu0 0.0
    %1756 = vmatpush1.msra.mxu0 0.0
    %1757 = vmatprep.subr.mxu0 0.0
    %1758 = vmatpush1.msra.mxu0 0.0
    %1759 = vmatprep.subr.mxu0 0.0
    %1760 = vmatpush1.msra.mxu0 0.0
    %1761 = vmatprep.subr.mxu0 0.0
    %1762 = vmatpush1.msra.mxu0 0.0
    %1763 = vmatprep.subr.mxu0 0.0
    %1764 = vmatpush1.msra.mxu0 0.0
    %1765 = vmatprep.subr.mxu0 0.0
    %1766 = vmatpush1.msra.mxu0 0.0
    %1767 = vmatprep.subr.mxu0 0.0
    %1768 = vmatpush1.msra.mxu0 0.0
    %1769 = vmatprep.subr.mxu0 0.0
    %1770 = vmatpush1.msra.mxu0 0.0
    %1771 = vmatprep.subr.mxu0 0.0
    %1772 = vmatpush1.msra.mxu0 0.0
    %1773 = vmatprep.subr.mxu0 0.0
    %1774 = vmatpush1.msra.mxu0 0.0
    %1775 = vmatprep.subr.mxu0 0.0
    %1776 = vmatpush1.msra.mxu0 0.0
    %1777 = vmatprep.subr.mxu0 0.0
    %1778 = vmatpush1.msra.mxu0 0.0
    %1779 = vmatprep.subr.mxu0 0.0
    %1780 = vmatpush1.msra.mxu0 0.0
    %1781 = vmatprep.subr.mxu0 0.0
    %1782 = vmatpush1.msra.mxu0 0.0
    %1783 = vmatprep.subr.mxu0 0.0
    %1784 = vmatpush1.msra.mxu0 0.0
    %1785 = vmatprep.subr.mxu0 0.0
    %1786 = vmatpush1.msra.mxu0 0.0
    %1787 = vmatprep.subr.mxu0 0.0
    %1788 = vmatpush1.msra.mxu0 0.0
    %1789 = vmatprep.subr.mxu0 0.0
    %1790 = vmatpush1.msra.mxu0 0.0
    %1791 = vmatprep.subr.mxu0 0.0
    %1792 = vmatpush1.msra.mxu0 0.0
    %1793 = vmatprep.subr.mxu0 0.0
    %1794 = vmatpush1.msra.mxu0 0.0
    %1795 = vmatprep.subr.mxu0 0.0
    %1796 = vmatpush1.msra.mxu0 0.0
    %1797 = vmatprep.subr.mxu0 0.0
    %1798 = vmatpush1.msra.mxu0 0.0
    %1799 = vmatprep.subr.mxu0 0.0
    %1800 = vmatpush1.msra.mxu0 0.0
    %1801 = vmatprep.mubr.f32.mxu0 0.0
    %1802 = vmatmul.mubr.f32.gmra.mrb[0].mxu0 %v1735
    %v1803 = vpop.f32.mrb[0].mxu0
    %v1804 = vadd.f32 %v1731, %v1803
    %v1805 = vpop.f32.mrb[0].mxu0
    %1806 = vdwg.mxu0
    %v1807 = vadd.f32 %v1804, %v925
    %v1808 = vtanh.pop %v1807
    %1809 = vmatprep.subr.mxu0 0.0
    %1810 = vmatpush1.msra.mxu0 %v72
    %1811 = vmatprep.subr.mxu0 0.0
    %1812 = vmatpush1.msra.mxu0 %v73
    %1813 = vmatprep.subr.mxu0 0.0
    %1814 = vmatpush1.msra.mxu0 %v74
    %1815 = vmatprep.subr.mxu0 0.0
    %1816 = vmatpush1.msra.mxu0 %v75
    %1817 = vmatprep.subr.mxu0 0.0
    %1818 = vmatpush1.msra.mxu0 0.0
    %1819 = vmatprep.subr.mxu0 0.0
    %1820 = vmatpush1.msra.mxu0 0.0
    %1821 = vmatprep.subr.mxu0 0.0
    %1822 = vmatpush1.msra.mxu0 0.0
    %1823 = vmatprep.subr.mxu0 0.0
    %1824 = vmatpush1.msra.mxu0 0.0
    %1825 = vmatprep.subr.mxu0 0.0
    %1826 = vmatpush1.msra.mxu0 0.0
    %1827 = vmatprep.subr.mxu0 0.0
    %1828 = vmatpush1.msra.mxu0 0.0
    %1829 = vmatprep.subr.mxu0 0.0
    %1830 = vmatpush1.msra.mxu0 0.0
    %1831 = vmatprep.subr.mxu0 0.0
    %1832 = vmatpush1.msra.mxu0 0.0
    %1833 = vmatprep.subr.mxu0 0.0
    %1834 = vmatpush1.msra.mxu0 0.0
    %1835 = vmatprep.subr.mxu0 0.0
    %1836 = vmatpush1.msra.mxu0 0.0
    %1837 = vmatprep.subr.mxu0 0.0
    %1838 = vmatpush1.msra.mxu0 0.0
    %1839 = vmatprep.subr.mxu0 0.0
    %1840 = vmatpush1.msra.mxu0 0.0
    %1841 = vmatprep.subr.mxu0 0.0
    %1842 = vmatpush1.msra.mxu0 0.0
    %1843 = vmatprep.subr.mxu0 0.0
    %1844 = vmatpush1.msra.mxu0 0.0
    %1845 = vmatprep.subr.mxu0 0.0
    %1846 = vmatpush1.msra.mxu0 0.0
    %1847 = vmatprep.subr.mxu0 0.0
    %1848 = vmatpush1.msra.mxu0 0.0
    %1849 = vmatprep.subr.mxu0 0.0
    %1850 = vmatpush1.msra.mxu0 0.0
    %1851 = vmatprep.subr.mxu0 0.0
    %1852 = vmatpush1.msra.mxu0 0.0
    %1853 = vmatprep.subr.mxu0 0.0
    %1854 = vmatpush1.msra.mxu0 0.0
    %1855 = vmatprep.subr.mxu0 0.0
    %1856 = vmatpush1.msra.mxu0 0.0
    %1857 = vmatprep.subr.mxu0 0.0
    %1858 = vmatpush1.msra.mxu0 0.0
    %1859 = vmatprep.subr.mxu0 0.0
    %1860 = vmatpush1.msra.mxu0 0.0
    %1861 = vmatprep.subr.mxu0 0.0
    %1862 = vmatpush1.msra.mxu0 0.0
    %1863 = vmatprep.subr.mxu0 0.0
    %1864 = vmatpush1.msra.mxu0 0.0
    %1865 = vmatprep.subr.mxu0 0.0
    %1866 = vmatpush1.msra.mxu0 0.0
    %1867 = vmatprep.subr.mxu0 0.0
    %1868 = vmatpush1.msra.mxu0 0.0
    %1869 = vmatprep.subr.mxu0 0.0
    %1870 = vmatpush1.msra.mxu0 0.0
    %1871 = vmatprep.subr.mxu0 0.0
    %1872 = vmatpush1.msra.mxu0 0.0
    %1873 = vmatprep.mubr.f32.mxu0 0.0
    %1874 = vmatmul.mubr.f32.gmra.mrb[0].mxu0 %v1735
    %v1875 = vpop.f32.mrb[0].mxu0
    %v1876 = vadd.f32 0.0, %v1875
    %v1877 = vpop.f32.mrb[0].mxu0
    %1878 = vdwg.mxu0
    %v1879 = vadd.f32 %v546, %v1876
    %v1880 = vtanh.pop %v1879
    %v1882 = vsel %vm699, %v1808, 0
    %1884 = vmatprep.subr.mxu0 0.0
    %1885 = vmatpush1.msra.mxu0 %v76
    %1886 = vmatprep.subr.mxu0 0.0
    %1887 = vmatpush1.msra.mxu0 %v77
    %1888 = vmatprep.subr.mxu0 0.0
    %1889 = vmatpush1.msra.mxu0 %v78
    %1890 = vmatprep.subr.mxu0 0.0
    %1891 = vmatpush1.msra.mxu0 %v79
    %1892 = vmatprep.subr.mxu0 0.0
    %1893 = vmatpush1.msra.mxu0 0.0
    %1894 = vmatprep.subr.mxu0 0.0
    %1895 = vmatpush1.msra.mxu0 0.0
    %1896 = vmatprep.subr.mxu0 0.0
    %1897 = vmatpush1.msra.mxu0 0.0
    %1898 = vmatprep.subr.mxu0 0.0
    %1899 = vmatpush1.msra.mxu0 0.0
    %1900 = vmatprep.subr.mxu0 0.0
    %1901 = vmatpush1.msra.mxu0 0.0
    %1902 = vmatprep.subr.mxu0 0.0
    %1903 = vmatpush1.msra.mxu0 0.0
    %1904 = vmatprep.subr.mxu0 0.0
    %1905 = vmatpush1.msra.mxu0 0.0
    %1906 = vmatprep.subr.mxu0 0.0
    %1907 = vmatpush1.msra.mxu0 0.0
    %1908 = vmatprep.subr.mxu0 0.0
    %1909 = vmatpush1.msra.mxu0 0.0
    %1910 = vmatprep.subr.mxu0 0.0
    %1911 = vmatpush1.msra.mxu0 0.0
    %1912 = vmatprep.subr.mxu0 0.0
    %1913 = vmatpush1.msra.mxu0 0.0
    %1914 = vmatprep.subr.mxu0 0.0
    %1915 = vmatpush1.msra.mxu0 0.0
    %1916 = vmatprep.subr.mxu0 0.0
    %1917 = vmatpush1.msra.mxu0 0.0
    %1918 = vmatprep.subr.mxu0 0.0
    %1919 = vmatpush1.msra.mxu0 0.0
    %1920 = vmatprep.subr.mxu0 0.0
    %1921 = vmatpush1.msra.mxu0 0.0
    %1922 = vmatprep.subr.mxu0 0.0
    %1923 = vmatpush1.msra.mxu0 0.0
    %1924 = vmatprep.subr.mxu0 0.0
    %1925 = vmatpush1.msra.mxu0 0.0
    %1926 = vmatprep.subr.mxu0 0.0
    %1927 = vmatpush1.msra.mxu0 0.0
    %1928 = vmatprep.subr.mxu0 0.0
    %1929 = vmatpush1.msra.mxu0 0.0
    %1930 = vmatprep.subr.mxu0 0.0
    %1931 = vmatpush1.msra.mxu0 0.0
    %1932 = vmatprep.subr.mxu0 0.0
    %1933 = vmatpush1.msra.mxu0 0.0
    %1934 = vmatprep.subr.mxu0 0.0
    %1935 = vmatpush1.msra.mxu0 0.0
    %1936 = vmatprep.subr.mxu0 0.0
    %1937 = vmatpush1.msra.mxu0 0.0
    %1938 = vmatprep.subr.mxu0 0.0
    %1939 = vmatpush1.msra.mxu0 0.0
    %1940 = vmatprep.subr.mxu0 0.0
    %1941 = vmatpush1.msra.mxu0 0.0
    %1942 = vmatprep.subr.mxu0 0.0
    %1943 = vmatpush1.msra.mxu0 0.0
    %1944 = vmatprep.subr.mxu0 0.0
    %1945 = vmatpush1.msra.mxu0 0.0
    %1946 = vmatprep.subr.mxu0 0.0
    %1947 = vmatpush1.msra.mxu0 0.0
    %1948 = vmatprep.mubr.f32.mxu0 0.0
    %1949 = vmatmul.mubr.f32.gmra.mrb[0].mxu0 %v1882
    %v1950 = vpop.f32.mrb[0].mxu0
    %v1951 = vadd.f32 0.0, %v1950
    %v1952 = vpop.f32.mrb[0].mxu0
    %1953 = vdwg.mxu0
    %v1955 = vsel %vm699, %v1880, 0
    %1957 = vmatprep.subr.mxu0 0.0
    %1958 = vmatpush1.msra.mxu0 %v68
    %1959 = vmatprep.subr.mxu0 0.0
    %1960 = vmatpush1.msra.mxu0 %v69
    %1961 = vmatprep.subr.mxu0 0.0
    %1962 = vmatpush1.msra.mxu0 %v70
    %1963 = vmatprep.subr.mxu0 0.0
    %1964 = vmatpush1.msra.mxu0 %v71
    %1965 = vmatprep.subr.mxu0 0.0
    %1966 = vmatpush1.msra.mxu0 0.0
    %1967 = vmatprep.subr.mxu0 0.0
    %1968 = vmatpush1.msra.mxu0 0.0
    %1969 = vmatprep.subr.mxu0 0.0
    %1970 = vmatpush1.msra.mxu0 0.0
    %1971 = vmatprep.subr.mxu0 0.0
    %1972 = vmatpush1.msra.mxu0 0.0
    %1973 = vmatprep.subr.mxu0 0.0
    %1974 = vmatpush1.msra.mxu0 0.0
    %1975 = vmatprep.subr.mxu0 0.0
    %1976 = vmatpush1.msra.mxu0 0.0
    %1977 = vmatprep.subr.mxu0 0.0
    %1978 = vmatpush1.msra.mxu0 0.0
    %1979 = vmatprep.subr.mxu0 0.0
    %1980 = vmatpush1.msra.mxu0 0.0
    %1981 = vmatprep.subr.mxu0 0.0
    %1982 = vmatpush1.msra.mxu0 0.0
    %1983 = vmatprep.subr.mxu0 0.0
    %1984 = vmatpush1.msra.mxu0 0.0
    %1985 = vmatprep.subr.mxu0 0.0
    %1986 = vmatpush1.msra.mxu0 0.0
    %1987 = vmatprep.subr.mxu0 0.0
    %1988 = vmatpush1.msra.mxu0 0.0
    %1989 = vmatprep.subr.mxu0 0.0
    %1990 = vmatpush1.msra.mxu0 0.0
    %1991 = vmatprep.subr.mxu0 0.0
    %1992 = vmatpush1.msra.mxu0 0.0
    %1993 = vmatprep.subr.mxu0 0.0
    %1994 = vmatpush1.msra.mxu0 0.0
    %1995 = vmatprep.subr.mxu0 0.0
    %1996 = vmatpush1.msra.mxu0 0.0
    %1997 = vmatprep.subr.mxu0 0.0
    %1998 = vmatpush1.msra.mxu0 0.0
    %1999 = vmatprep.subr.mxu0 0.0
    %2000 = vmatpush1.msra.mxu0 0.0
    %2001 = vmatprep.subr.mxu0 0.0
    %2002 = vmatpush1.msra.mxu0 0.0
    %2003 = vmatprep.subr.mxu0 0.0
    %2004 = vmatpush1.msra.mxu0 0.0
    %2005 = vmatprep.subr.mxu0 0.0
    %2006 = vmatpush1.msra.mxu0 0.0
    %2007 = vmatprep.subr.mxu0 0.0
    %2008 = vmatpush1.msra.mxu0 0.0
    %2009 = vmatprep.subr.mxu0 0.0
    %2010 = vmatpush1.msra.mxu0 0.0
    %2011 = vmatprep.subr.mxu0 0.0
    %2012 = vmatpush1.msra.mxu0 0.0
    %2013 = vmatprep.subr.mxu0 0.0
    %2014 = vmatpush1.msra.mxu0 0.0
    %2015 = vmatprep.subr.mxu0 0.0
    %2016 = vmatpush1.msra.mxu0 0.0
    %2017 = vmatprep.subr.mxu0 0.0
    %2018 = vmatpush1.msra.mxu0 0.0
    %2019 = vmatprep.subr.mxu0 0.0
    %2020 = vmatpush1.msra.mxu0 0.0
    %2021 = vmatprep.mubr.f32.mxu0 0.0
    %2022 = vmatmul.mubr.f32.gmra.mrb[0].mxu0 %v1955
    %v2023 = vpop.f32.mrb[0].mxu0
    %v2024 = vadd.f32 %v1951, %v2023
    %v2025 = vpop.f32.mrb[0].mxu0
    %2026 = vdwg.mxu0
    %v2027 = vadd.f32 %v2024, %v925
    %v2028 = vtanh.pop %v2027
    %2029 = vmatprep.subr.mxu0 0.0
    %2030 = vmatpush1.msra.mxu0 %v72
    %2031 = vmatprep.subr.mxu0 0.0
    %2032 = vmatpush1.msra.mxu0 %v73
    %2033 = vmatprep.subr.mxu0 0.0
    %2034 = vmatpush1.msra.mxu0 %v74
    %2035 = vmatprep.subr.mxu0 0.0
    %2036 = vmatpush1.msra.mxu0 %v75
    %2037 = vmatprep.subr.mxu0 0.0
    %2038 = vmatpush1.msra.mxu0 0.0
    %2039 = vmatprep.subr.mxu0 0.0
    %2040 = vmatpush1.msra.mxu0 0.0
    %2041 = vmatprep.subr.mxu0 0.0
    %2042 = vmatpush1.msra.mxu0 0.0
    %2043 = vmatprep.subr.mxu0 0.0
    %2044 = vmatpush1.msra.mxu0 0.0
    %2045 = vmatprep.subr.mxu0 0.0
    %2046 = vmatpush1.msra.mxu0 0.0
    %2047 = vmatprep.subr.mxu0 0.0
    %2048 = vmatpush1.msra.mxu0 0.0
    %2049 = vmatprep.subr.mxu0 0.0
    %2050 = vmatpush1.msra.mxu0 0.0
    %2051 = vmatprep.subr.mxu0 0.0
    %2052 = vmatpush1.msra.mxu0 0.0
    %2053 = vmatprep.subr.mxu0 0.0
    %2054 = vmatpush1.msra.mxu0 0.0
    %2055 = vmatprep.subr.mxu0 0.0
    %2056 = vmatpush1.msra.mxu0 0.0
    %2057 = vmatprep.subr.mxu0 0.0
    %2058 = vmatpush1.msra.mxu0 0.0
    %2059 = vmatprep.subr.mxu0 0.0
    %2060 = vmatpush1.msra.mxu0 0.0
    %2061 = vmatprep.subr.mxu0 0.0
    %2062 = vmatpush1.msra.mxu0 0.0
    %2063 = vmatprep.subr.mxu0 0.0
    %2064 = vmatpush1.msra.mxu0 0.0
    %2065 = vmatprep.subr.mxu0 0.0
    %2066 = vmatpush1.msra.mxu0 0.0
    %2067 = vmatprep.subr.mxu0 0.0
    %2068 = vmatpush1.msra.mxu0 0.0
    %2069 = vmatprep.subr.mxu0 0.0
    %2070 = vmatpush1.msra.mxu0 0.0
    %2071 = vmatprep.subr.mxu0 0.0
    %2072 = vmatpush1.msra.mxu0 0.0
    %2073 = vmatprep.subr.mxu0 0.0
    %2074 = vmatpush1.msra.mxu0 0.0
    %2075 = vmatprep.subr.mxu0 0.0
    %2076 = vmatpush1.msra.mxu0 0.0
    %2077 = vmatprep.subr.mxu0 0.0
    %2078 = vmatpush1.msra.mxu0 0.0
    %2079 = vmatprep.subr.mxu0 0.0
    %2080 = vmatpush1.msra.mxu0 0.0
    %2081 = vmatprep.subr.mxu0 0.0
    %2082 = vmatpush1.msra.mxu0 0.0
    %2083 = vmatprep.subr.mxu0 0.0
    %2084 = vmatpush1.msra.mxu0 0.0
    %2085 = vmatprep.subr.mxu0 0.0
    %2086 = vmatpush1.msra.mxu0 0.0
    %2087 = vmatprep.subr.mxu0 0.0
    %2088 = vmatpush1.msra.mxu0 0.0
    %2089 = vmatprep.subr.mxu0 0.0
    %2090 = vmatpush1.msra.mxu0 0.0
    %2091 = vmatprep.subr.mxu0 0.0
    %2092 = vmatpush1.msra.mxu0 0.0
    %2093 = vmatprep.mubr.f32.mxu0 0.0
    %2094 = vmatmul.mubr.f32.gmra.mrb[0].mxu0 %v1955
    %v2095 = vpop.f32.mrb[0].mxu0
    %v2096 = vadd.f32 0.0, %v2095
    %v2097 = vpop.f32.mrb[0].mxu0
    %2098 = vdwg.mxu0
    %v2099 = vadd.f32 %v621, %v2096
    %v2100 = vtanh.pop %v2099
    %v2102 = vsel %vm699, %v2028, 0
    %2104 = vmatprep.subr.mxu0 0.0
    %2105 = vmatpush1.msra.mxu0 %v76
    %2106 = vmatprep.subr.mxu0 0.0
    %2107 = vmatpush1.msra.mxu0 %v77
    %2108 = vmatprep.subr.mxu0 0.0
    %2109 = vmatpush1.msra.mxu0 %v78
    %2110 = vmatprep.subr.mxu0 0.0
    %2111 = vmatpush1.msra.mxu0 %v79
    %2112 = vmatprep.subr.mxu0 0.0
    %2113 = vmatpush1.msra.mxu0 0.0
    %2114 = vmatprep.subr.mxu0 0.0
    %2115 = vmatpush1.msra.mxu0 0.0
    %2116 = vmatprep.subr.mxu0 0.0
    %2117 = vmatpush1.msra.mxu0 0.0
    %2118 = vmatprep.subr.mxu0 0.0
    %2119 = vmatpush1.msra.mxu0 0.0
    %2120 = vmatprep.subr.mxu0 0.0
    %2121 = vmatpush1.msra.mxu0 0.0
    %2122 = vmatprep.subr.mxu0 0.0
    %2123 = vmatpush1.msra.mxu0 0.0
    %2124 = vmatprep.subr.mxu0 0.0
    %2125 = vmatpush1.msra.mxu0 0.0
    %2126 = vmatprep.subr.mxu0 0.0
    %2127 = vmatpush1.msra.mxu0 0.0
    %2128 = vmatprep.subr.mxu0 0.0
    %2129 = vmatpush1.msra.mxu0 0.0
    %2130 = vmatprep.subr.mxu0 0.0
    %2131 = vmatpush1.msra.mxu0 0.0
    %2132 = vmatprep.subr.mxu0 0.0
    %2133 = vmatpush1.msra.mxu0 0.0
    %2134 = vmatprep.subr.mxu0 0.0
    %2135 = vmatpush1.msra.mxu0 0.0
    %2136 = vmatprep.subr.mxu0 0.0
    %2137 = vmatpush1.msra.mxu0 0.0
    %2138 = vmatprep.subr.mxu0 0.0
    %2139 = vmatpush1.msra.mxu0 0.0
    %2140 = vmatprep.subr.mxu0 0.0
    %2141 = vmatpush1.msra.mxu0 0.0
    %2142 = vmatprep.subr.mxu0 0.0
    %2143 = vmatpush1.msra.mxu0 0.0
    %2144 = vmatprep.subr.mxu0 0.0
    %2145 = vmatpush1.msra.mxu0 0.0
    %2146 = vmatprep.subr.mxu0 0.0
    %2147 = vmatpush1.msra.mxu0 0.0
    %2148 = vmatprep.subr.mxu0 0.0
    %2149 = vmatpush1.msra.mxu0 0.0
    %2150 = vmatprep.subr.mxu0 0.0
    %2151 = vmatpush1.msra.mxu0 0.0
    %2152 = vmatprep.subr.mxu0 0.0
    %2153 = vmatpush1.msra.mxu0 0.0
    %2154 = vmatprep.subr.mxu0 0.0
    %2155 = vmatpush1.msra.mxu0 0.0
    %2156 = vmatprep.subr.mxu0 0.0
    %2157 = vmatpush1.msra.mxu0 0.0
    %2158 = vmatprep.subr.mxu0 0.0
    %2159 = vmatpush1.msra.mxu0 0.0
    %2160 = vmatprep.subr.mxu0 0.0
    %2161 = vmatpush1.msra.mxu0 0.0
    %2162 = vmatprep.subr.mxu0 0.0
    %2163 = vmatpush1.msra.mxu0 0.0
    %2164 = vmatprep.subr.mxu0 0.0
    %2165 = vmatpush1.msra.mxu0 0.0
    %2166 = vmatprep.subr.mxu0 0.0
    %2167 = vmatpush1.msra.mxu0 0.0
    %2168 = vmatprep.mubr.f32.mxu0 0.0
    %2169 = vmatmul.mubr.f32.gmra.mrb[0].mxu0 %v2102
    %v2170 = vpop.f32.mrb[0].mxu0
    %v2171 = vadd.f32 0.0, %v2170
    %v2172 = vpop.f32.mrb[0].mxu0
    %2173 = vdwg.mxu0
    %v2175 = vsel %vm699, %v2100, 0
    %2177 = vmatprep.subr.mxu0 0.0
    %2178 = vmatpush1.msra.mxu0 %v68
    %2179 = vmatprep.subr.mxu0 0.0
    %2180 = vmatpush1.msra.mxu0 %v69
    %2181 = vmatprep.subr.mxu0 0.0
    %2182 = vmatpush1.msra.mxu0 %v70
    %2183 = vmatprep.subr.mxu0 0.0
    %2184 = vmatpush1.msra.mxu0 %v71
    %2185 = vmatprep.subr.mxu0 0.0
    %2186 = vmatpush1.msra.mxu0 0.0
    %2187 = vmatprep.subr.mxu0 0.0
    %2188 = vmatpush1.msra.mxu0 0.0
    %2189 = vmatprep.subr.mxu0 0.0
    %2190 = vmatpush1.msra.mxu0 0.0
    %2191 = vmatprep.subr.mxu0 0.0
    %2192 = vmatpush1.msra.mxu0 0.0
    %2193 = vmatprep.subr.mxu0 0.0
    %2194 = vmatpush1.msra.mxu0 0.0
    %2195 = vmatprep.subr.mxu0 0.0
    %2196 = vmatpush1.msra.mxu0 0.0
    %2197 = vmatprep.subr.mxu0 0.0
    %2198 = vmatpush1.msra.mxu0 0.0
    %2199 = vmatprep.subr.mxu0 0.0
    %2200 = vmatpush1.msra.mxu0 0.0
    %2201 = vmatprep.subr.mxu0 0.0
    %2202 = vmatpush1.msra.mxu0 0.0
    %2203 = vmatprep.subr.mxu0 0.0
    %2204 = vmatpush1.msra.mxu0 0.0
    %2205 = vmatprep.subr.mxu0 0.0
    %2206 = vmatpush1.msra.mxu0 0.0
    %2207 = vmatprep.subr.mxu0 0.0
    %2208 = vmatpush1.msra.mxu0 0.0
    %2209 = vmatprep.subr.mxu0 0.0
    %2210 = vmatpush1.msra.mxu0 0.0
    %2211 = vmatprep.subr.mxu0 0.0
    %2212 = vmatpush1.msra.mxu0 0.0
    %2213 = vmatprep.subr.mxu0 0.0
    %2214 = vmatpush1.msra.mxu0 0.0
    %2215 = vmatprep.subr.mxu0 0.0
    %2216 = vmatpush1.msra.mxu0 0.0
    %2217 = vmatprep.subr.mxu0 0.0
    %2218 = vmatpush1.msra.mxu0 0.0
    %2219 = vmatprep.subr.mxu0 0.0
    %2220 = vmatpush1.msra.mxu0 0.0
    %2221 = vmatprep.subr.mxu0 0.0
    %2222 = vmatpush1.msra.mxu0 0.0
    %2223 = vmatprep.subr.mxu0 0.0
    %2224 = vmatpush1.msra.mxu0 0.0
    %2225 = vmatprep.subr.mxu0 0.0
    %2226 = vmatpush1.msra.mxu0 0.0
    %2227 = vmatprep.subr.mxu0 0.0
    %2228 = vmatpush1.msra.mxu0 0.0
    %2229 = vmatprep.subr.mxu0 0.0
    %2230 = vmatpush1.msra.mxu0 0.0
    %2231 = vmatprep.subr.mxu0 0.0
    %2232 = vmatpush1.msra.mxu0 0.0
    %2233 = vmatprep.subr.mxu0 0.0
    %2234 = vmatpush1.msra.mxu0 0.0
    %2235 = vmatprep.subr.mxu0 0.0
    %2236 = vmatpush1.msra.mxu0 0.0
    %2237 = vmatprep.subr.mxu0 0.0
    %2238 = vmatpush1.msra.mxu0 0.0
    %2239 = vmatprep.subr.mxu0 0.0
    %2240 = vmatpush1.msra.mxu0 0.0
    %2241 = vmatprep.mubr.f32.mxu0 0.0
    %2242 = vmatmul.mubr.f32.gmra.mrb[0].mxu0 %v2175
    %v2243 = vpop.f32.mrb[0].mxu0
    %v2244 = vadd.f32 %v2171, %v2243
    %v2245 = vpop.f32.mrb[0].mxu0
    %2246 = vdwg.mxu0
    %v2247 = vadd.f32 %v2244, %v925
    %v2248 = vtanh.pop %v2247
    %2249 = vmatprep.subr.mxu0 0.0
    %2250 = vmatpush1.msra.mxu0 %v72
    %2251 = vmatprep.subr.mxu0 0.0
    %2252 = vmatpush1.msra.mxu0 %v73
    %2253 = vmatprep.subr.mxu0 0.0
    %2254 = vmatpush1.msra.mxu0 %v74
    %2255 = vmatprep.subr.mxu0 0.0
    %2256 = vmatpush1.msra.mxu0 %v75
    %2257 = vmatprep.subr.mxu0 0.0
    %2258 = vmatpush1.msra.mxu0 0.0
    %2259 = vmatprep.subr.mxu0 0.0
    %2260 = vmatpush1.msra.mxu0 0.0
    %2261 = vmatprep.subr.mxu0 0.0
    %2262 = vmatpush1.msra.mxu0 0.0
    %2263 = vmatprep.subr.mxu0 0.0
    %2264 = vmatpush1.msra.mxu0 0.0
    %2265 = vmatprep.subr.mxu0 0.0
    %2266 = vmatpush1.msra.mxu0 0.0
    %2267 = vmatprep.subr.mxu0 0.0
    %2268 = vmatpush1.msra.mxu0 0.0
    %2269 = vmatprep.subr.mxu0 0.0
    %2270 = vmatpush1.msra.mxu0 0.0
    %2271 = vmatprep.subr.mxu0 0.0
    %2272 = vmatpush1.msra.mxu0 0.0
    %2273 = vmatprep.subr.mxu0 0.0
    %2274 = vmatpush1.msra.mxu0 0.0
    %2275 = vmatprep.subr.mxu0 0.0
    %2276 = vmatpush1.msra.mxu0 0.0
    %2277 = vmatprep.subr.mxu0 0.0
    %2278 = vmatpush1.msra.mxu0 0.0
    %2279 = vmatprep.subr.mxu0 0.0
    %2280 = vmatpush1.msra.mxu0 0.0
    %2281 = vmatprep.subr.mxu0 0.0
    %2282 = vmatpush1.msra.mxu0 0.0
    %2283 = vmatprep.subr.mxu0 0.0
    %2284 = vmatpush1.msra.mxu0 0.0
    %2285 = vmatprep.subr.mxu0 0.0
    %2286 = vmatpush1.msra.mxu0 0.0
    %2287 = vmatprep.subr.mxu0 0.0
    %2288 = vmatpush1.msra.mxu0 0.0
    %2289 = vmatprep.subr.mxu0 0.0
    %2290 = vmatpush1.msra.mxu0 0.0
    %2291 = vmatprep.subr.mxu0 0.0
    %2292 = vmatpush1.msra.mxu0 0.0
    %2293 = vmatprep.subr.mxu0 0.0
    %2294 = vmatpush1.msra.mxu0 0.0
    %2295 = vmatprep.subr.mxu0 0.0
    %2296 = vmatpush1.msra.mxu0 0.0
    %2297 = vmatprep.subr.mxu0 0.0
    %2298 = vmatpush1.msra.mxu0 0.0
    %2299 = vmatprep.subr.mxu0 0.0
    %2300 = vmatpush1.msra.mxu0 0.0
    %2301 = vmatprep.subr.mxu0 0.0
    %2302 = vmatpush1.msra.mxu0 0.0
    %2303 = vmatprep.subr.mxu0 0.0
    %2304 = vmatpush1.msra.mxu0 0.0
    %2305 = vmatprep.subr.mxu0 0.0
    %2306 = vmatpush1.msra.mxu0 0.0
    %2307 = vmatprep.subr.mxu0 0.0
    %2308 = vmatpush1.msra.mxu0 0.0
    %2309 = vmatprep.subr.mxu0 0.0
    %2310 = vmatpush1.msra.mxu0 0.0
    %2311 = vmatprep.subr.mxu0 0.0
    %2312 = vmatpush1.msra.mxu0 0.0
    %2313 = vmatprep.mubr.f32.mxu0 0.0
    %2314 = vmatmul.mubr.f32.gmra.mrb[0].mxu0 %v2175
    %v2315 = vpop.f32.mrb[0].mxu0
    %v2316 = vadd.f32 0.0, %v2315
    %v2317 = vpop.f32.mrb[0].mxu0
    %2318 = vdwg.mxu0
    %v2319 = vadd.f32 %v696, %v2316
    %v2320 = vtanh.pop %v2319
    %v2322 = vsel %vm699, %v2248, 0
    %2324 = vmatprep.subr.mxu0 0.0
    %2325 = vmatpush1.msra.mxu0 %v76
    %2326 = vmatprep.subr.mxu0 0.0
    %2327 = vmatpush1.msra.mxu0 %v77
    %2328 = vmatprep.subr.mxu0 0.0
    %2329 = vmatpush1.msra.mxu0 %v78
    %2330 = vmatprep.subr.mxu0 0.0
    %2331 = vmatpush1.msra.mxu0 %v79
    %2332 = vmatprep.subr.mxu0 0.0
    %2333 = vmatpush1.msra.mxu0 0.0
    %2334 = vmatprep.subr.mxu0 0.0
    %2335 = vmatpush1.msra.mxu0 0.0
    %2336 = vmatprep.subr.mxu0 0.0
    %2337 = vmatpush1.msra.mxu0 0.0
    %2338 = vmatprep.subr.mxu0 0.0
    %2339 = vmatpush1.msra.mxu0 0.0
    %2340 = vmatprep.subr.mxu0 0.0
    %2341 = vmatpush1.msra.mxu0 0.0
    %2342 = vmatprep.subr.mxu0 0.0
    %2343 = vmatpush1.msra.mxu0 0.0
    %2344 = vmatprep.subr.mxu0 0.0
    %2345 = vmatpush1.msra.mxu0 0.0
    %2346 = vmatprep.subr.mxu0 0.0
    %2347 = vmatpush1.msra.mxu0 0.0
    %2348 = vmatprep.subr.mxu0 0.0
    %2349 = vmatpush1.msra.mxu0 0.0
    %2350 = vmatprep.subr.mxu0 0.0
    %2351 = vmatpush1.msra.mxu0 0.0
    %2352 = vmatprep.subr.mxu0 0.0
    %2353 = vmatpush1.msra.mxu0 0.0
    %2354 = vmatprep.subr.mxu0 0.0
    %2355 = vmatpush1.msra.mxu0 0.0
    %2356 = vmatprep.subr.mxu0 0.0
    %2357 = vmatpush1.msra.mxu0 0.0
    %2358 = vmatprep.subr.mxu0 0.0
    %2359 = vmatpush1.msra.mxu0 0.0
    %2360 = vmatprep.subr.mxu0 0.0
    %2361 = vmatpush1.msra.mxu0 0.0
    %2362 = vmatprep.subr.mxu0 0.0
    %2363 = vmatpush1.msra.mxu0 0.0
    %2364 = vmatprep.subr.mxu0 0.0
    %2365 = vmatpush1.msra.mxu0 0.0
    %2366 = vmatprep.subr.mxu0 0.0
    %2367 = vmatpush1.msra.mxu0 0.0
    %2368 = vmatprep.subr.mxu0 0.0
    %2369 = vmatpush1.msra.mxu0 0.0
    %2370 = vmatprep.subr.mxu0 0.0
    %2371 = vmatpush1.msra.mxu0 0.0
    %2372 = vmatprep.subr.mxu0 0.0
    %2373 = vmatpush1.msra.mxu0 0.0
    %2374 = vmatprep.subr.mxu0 0.0
    %2375 = vmatpush1.msra.mxu0 0.0
    %2376 = vmatprep.subr.mxu0 0.0
    %2377 = vmatpush1.msra.mxu0 0.0
    %2378 = vmatprep.subr.mxu0 0.0
    %2379 = vmatpush1.msra.mxu0 0.0
    %2380 = vmatprep.subr.mxu0 0.0
    %2381 = vmatpush1.msra.mxu0 0.0
    %2382 = vmatprep.subr.mxu0 0.0
    %2383 = vmatpush1.msra.mxu0 0.0
    %2384 = vmatprep.subr.mxu0 0.0
    %2385 = vmatpush1.msra.mxu0 0.0
    %2386 = vmatprep.subr.mxu0 0.0
    %2387 = vmatpush1.msra.mxu0 0.0
    %2388 = vmatprep.mubr.f32.mxu0 0.0
    %2389 = vmatmul.mubr.f32.gmra.mrb[0].mxu0 %v2322
    %v2390 = vpop.f32.mrb[0].mxu0
    %v2391 = vadd.f32 0.0, %v2390
    %v2392 = vpop.f32.mrb[0].mxu0
    %2393 = vdwg.mxu0
    %v2395 = vsel %vm699, %v2320, 0
    %2397 = vmatprep.subr.mxu0 0.0
    %2398 = vmatpush1.msra.mxu0 %v68
    %2399 = vmatprep.subr.mxu0 0.0
    %2400 = vmatpush1.msra.mxu0 %v69
    %2401 = vmatprep.subr.mxu0 0.0
    %2402 = vmatpush1.msra.mxu0 %v70
    %2403 = vmatprep.subr.mxu0 0.0
    %2404 = vmatpush1.msra.mxu0 %v71
    %2405 = vmatprep.subr.mxu0 0.0
    %2406 = vmatpush1.msra.mxu0 0.0
    %2407 = vmatprep.subr.mxu0 0.0
    %2408 = vmatpush1.msra.mxu0 0.0
    %2409 = vmatprep.subr.mxu0 0.0
    %2410 = vmatpush1.msra.mxu0 0.0
    %2411 = vmatprep.subr.mxu0 0.0
    %2412 = vmatpush1.msra.mxu0 0.0
    %2413 = vmatprep.subr.mxu0 0.0
    %2414 = vmatpush1.msra.mxu0 0.0
    %2415 = vmatprep.subr.mxu0 0.0
    %2416 = vmatpush1.msra.mxu0 0.0
    %2417 = vmatprep.subr.mxu0 0.0
    %2418 = vmatpush1.msra.mxu0 0.0
    %2419 = vmatprep.subr.mxu0 0.0
    %2420 = vmatpush1.msra.mxu0 0.0
    %2421 = vmatprep.subr.mxu0 0.0
    %2422 = vmatpush1.msra.mxu0 0.0
    %2423 = vmatprep.subr.mxu0 0.0
    %2424 = vmatpush1.msra.mxu0 0.0
    %2425 = vmatprep.subr.mxu0 0.0
    %2426 = vmatpush1.msra.mxu0 0.0
    %2427 = vmatprep.subr.mxu0 0.0
    %2428 = vmatpush1.msra.mxu0 0.0
    %2429 = vmatprep.subr.mxu0 0.0
    %2430 = vmatpush1.msra.mxu0 0.0
    %2431 = vmatprep.subr.mxu0 0.0
    %2432 = vmatpush1.msra.mxu0 0.0
    %2433 = vmatprep.subr.mxu0 0.0
    %2434 = vmatpush1.msra.mxu0 0.0
    %2435 = vmatprep.subr.mxu0 0.0
    %2436 = vmatpush1.msra.mxu0 0.0
    %2437 = vmatprep.subr.mxu0 0.0
    %2438 = vmatpush1.msra.mxu0 0.0
    %2439 = vmatprep.subr.mxu0 0.0
    %2440 = vmatpush1.msra.mxu0 0.0
    %2441 = vmatprep.subr.mxu0 0.0
    %2442 = vmatpush1.msra.mxu0 0.0
    %2443 = vmatprep.subr.mxu0 0.0
    %2444 = vmatpush1.msra.mxu0 0.0
    %2445 = vmatprep.subr.mxu0 0.0
    %2446 = vmatpush1.msra.mxu0 0.0
    %2447 = vmatprep.subr.mxu0 0.0
    %2448 = vmatpush1.msra.mxu0 0.0
    %2449 = vmatprep.subr.mxu0 0.0
    %2450 = vmatpush1.msra.mxu0 0.0
    %2451 = vmatprep.subr.mxu0 0.0
    %2452 = vmatpush1.msra.mxu0 0.0
    %2453 = vmatprep.subr.mxu0 0.0
    %2454 = vmatpush1.msra.mxu0 0.0
    %2455 = vmatprep.subr.mxu0 0.0
    %2456 = vmatpush1.msra.mxu0 0.0
    %2457 = vmatprep.subr.mxu0 0.0
    %2458 = vmatpush1.msra.mxu0 0.0
    %2459 = vmatprep.subr.mxu0 0.0
    %2460 = vmatpush1.msra.mxu0 0.0
    %2461 = vmatprep.mubr.f32.mxu0 0.0
    %2462 = vmatmul.mubr.f32.gmra.mrb[0].mxu0 %v2395
    %v2463 = vpop.f32.mrb[0].mxu0
    %v2464 = vadd.f32 %v2391, %v2463
    %v2465 = vpop.f32.mrb[0].mxu0
    %2466 = vdwg.mxu0
    %v2467 = vadd.f32 %v2464, %v925
    %v2468 = vtanh.pop %v2467
    %vm2469 = vcmask 254976
    %2470 = vst.msk [vmem:[#allocation8] sm:$0x3] %vm2469, %v2320
    %s2471 = scalar_lea.vmem [#allocation8], 2
    %2472 = vst.msk [vmem:[%s2471] sm:$0x3] %vm2469, %v2468
    %p2473 = scmp.eq.s32.totalorder 0, 0
    // Predicated region
    $region50: #{my_rnn_forward.1} parent=1 // pred_check
      %p2474 = pneg %p2473
    $region51: #{my_rnn_forward.1} parent=1 // pred_check_branch
      %2476 = sbr.rel (%p2474) target = $region53
    $region52: #{my_rnn_forward.1} parent=1 // pred_region
      %v2477 = vld [vmem:[%s8] sm:$0xff]
      %v2478 = vld [vmem:[%s8 + $0x8] sm:$0xff]
      %v2479 = vld [vmem:[%s8 + $0x10] sm:$0xff]
      %v2480 = vld [vmem:[%s8 + $0x18] sm:$0xff]
      %v2481 = vld [vmem:[%s9] sm:$0x1]
      %v2483 = vlaneseq
      %v2484 = vshrl.u32 %v2483, 7
      %v2485 = vsub.s32 0, %v2484
      %v2486 = vrot.slane %v2481, %v2485
      %v2489 = vsel %vm699, %v2468, 0
      %2491 = vmatprep.subr.mxu0 0.0
      %2492 = vmatpush1.msra.mxu0 %v2477
      %2493 = vmatprep.subr.mxu0 0.0
      %2494 = vmatpush1.msra.mxu0 %v2478
      %2495 = vmatprep.subr.mxu0 0.0
      %2496 = vmatpush1.msra.mxu0 %v2479
      %2497 = vmatprep.subr.mxu0 0.0
      %2498 = vmatpush1.msra.mxu0 %v2480
      %2499 = vmatprep.subr.mxu0 0.0
      %2500 = vmatpush1.msra.mxu0 0.0
      %2501 = vmatprep.subr.mxu0 0.0
      %2502 = vmatpush1.msra.mxu0 0.0
      %2503 = vmatprep.subr.mxu0 0.0
      %2504 = vmatpush1.msra.mxu0 0.0
      %2505 = vmatprep.subr.mxu0 0.0
      %2506 = vmatpush1.msra.mxu0 0.0
      %2507 = vmatprep.subr.mxu0 0.0
      %2508 = vmatpush1.msra.mxu0 0.0
      %2509 = vmatprep.subr.mxu0 0.0
      %2510 = vmatpush1.msra.mxu0 0.0
      %2511 = vmatprep.subr.mxu0 0.0
      %2512 = vmatpush1.msra.mxu0 0.0
      %2513 = vmatprep.subr.mxu0 0.0
      %2514 = vmatpush1.msra.mxu0 0.0
      %2515 = vmatprep.subr.mxu0 0.0
      %2516 = vmatpush1.msra.mxu0 0.0
      %2517 = vmatprep.subr.mxu0 0.0
      %2518 = vmatpush1.msra.mxu0 0.0
      %2519 = vmatprep.subr.mxu0 0.0
      %2520 = vmatpush1.msra.mxu0 0.0
      %2521 = vmatprep.subr.mxu0 0.0
      %2522 = vmatpush1.msra.mxu0 0.0
      %2523 = vmatprep.subr.mxu0 0.0
      %2524 = vmatpush1.msra.mxu0 0.0
      %2525 = vmatprep.subr.mxu0 0.0
      %2526 = vmatpush1.msra.mxu0 0.0
      %2527 = vmatprep.subr.mxu0 0.0
      %2528 = vmatpush1.msra.mxu0 0.0
      %2529 = vmatprep.subr.mxu0 0.0
      %2530 = vmatpush1.msra.mxu0 0.0
      %2531 = vmatprep.subr.mxu0 0.0
      %2532 = vmatpush1.msra.mxu0 0.0
      %2533 = vmatprep.subr.mxu0 0.0
      %2534 = vmatpush1.msra.mxu0 0.0
      %2535 = vmatprep.subr.mxu0 0.0
      %2536 = vmatpush1.msra.mxu0 0.0
      %2537 = vmatprep.subr.mxu0 0.0
      %2538 = vmatpush1.msra.mxu0 0.0
      %2539 = vmatprep.subr.mxu0 0.0
      %2540 = vmatpush1.msra.mxu0 0.0
      %2541 = vmatprep.subr.mxu0 0.0
      %2542 = vmatpush1.msra.mxu0 0.0
      %2543 = vmatprep.subr.mxu0 0.0
      %2544 = vmatpush1.msra.mxu0 0.0
      %2545 = vmatprep.subr.mxu0 0.0
      %2546 = vmatpush1.msra.mxu0 0.0
      %2547 = vmatprep.subr.mxu0 0.0
      %2548 = vmatpush1.msra.mxu0 0.0
      %2549 = vmatprep.subr.mxu0 0.0
      %2550 = vmatpush1.msra.mxu0 0.0
      %2551 = vmatprep.subr.mxu0 0.0
      %2552 = vmatpush1.msra.mxu0 0.0
      %2553 = vmatprep.subr.mxu0 0.0
      %2554 = vmatpush1.msra.mxu0 0.0
      %2555 = vmatprep.mubr.f32.mxu0 0.0
      %2556 = vmatmul.mubr.f32.gmra.mrb[0].mxu0 %v2489
      %v2557 = vpop.f32.mrb[0].mxu0
      %v2558 = vadd.f32 %v2486, %v2557
      %v2559 = vpop.f32.mrb[0].mxu0
      %2560 = vdwg.mxu0
      %vm2561 = vcmask 17408
      %2562 = vst.msk [vmem:[#allocation7] sm:$0x3] %vm2561, %v2558
    $region53: #{my_rnn_forward.1} parent=1 // pred_fallthru
      _
    // Predicated region
    $region54: #{my_rnn_forward.1} parent=1 // pred_check
      _
    $region55: #{my_rnn_forward.1} parent=1 // pred_check_branch
      %2564 = sbr.rel (0) target = $region57
    $region56: #{my_rnn_forward.1} parent=1 // pred_region
      %s2566 = ssub.s32 32, 32
      %2567 = vsyncadd [#allocation4], %s2566
      %s2569 = sshll.u32 [#allocation7], 4
      %s2570 = int_to_ptr.vmem [resolvable:$true] %s2569
      %2572 = dma.vmem_to_hbm [thread:$0]  %s2570, 32, %s10, [#allocation4]
    $region57: #{my_rnn_forward.1} parent=1 // pred_fallthru
      _
    // Predicated region
    $region58: #{my_rnn_forward.1} parent=1 // pred_check
      _
    $region59: #{my_rnn_forward.1} parent=1 // pred_check_branch
      %2574 = sbr.rel (0) target = $region61
    $region60: #{my_rnn_forward.1} parent=1 // pred_region
      %s2576 = ssub.s32 64, 64
      %2577 = vsyncadd [#allocation9], %s2576
      %s2578 = sshll.u32 [#allocation8], 4
      %s2579 = int_to_ptr.vmem [resolvable:$true] %s2578
      %2584 = dma.vmem_to_hbm [thread:$0]  %s2579, 64, %s11, [#allocation9], 32, 32, 2
    $region61: #{my_rnn_forward.1} parent=1 // pred_fallthru
      _
    // Predicated region
    $region62: #{my_rnn_forward.1} parent=1 // pred_check
      _
    $region63: #{my_rnn_forward.1} parent=1 // pred_check_branch
      %2586 = sbr.rel (0) target = $region65
    $region64: #{my_rnn_forward.1} parent=1 // pred_region
      %2587 = dma.done [#allocation4], 32
    $region65: #{my_rnn_forward.1} parent=1 // pred_fallthru
      _
    // Predicated region
    $region66: #{my_rnn_forward.1} parent=1 // pred_check
      _
    $region67: #{my_rnn_forward.1} parent=1 // pred_check_branch
      %2589 = sbr.rel (0) target = $region69
    $region68: #{my_rnn_forward.1} parent=1 // pred_region
      %2590 = dma.done [#allocation9], 64
    $region69: #{my_rnn_forward.1} parent=1 // pred_fallthru
      _
    %2591 = vsyncpa [#allocation3], 1
    %2592 = vsyncpa [#allocation6], 1
    %2593 = vsyncpa [#allocation4], 1
    %2594 = vsyncpa [#allocation9], 1

</llo_original>
